<compile_context>
chip_gen: v5e
topology: v5e:2x2
jax: 0.10.0
libtpu: 0.0.40
codegen_flags: <defaults>
</compile_context>

<pallas_src>
import jax
import jax.numpy as jnp
from jax.experimental import pallas as pl
from jax.experimental.pallas import tpu as pltpu


def _make_head_kernel(offsets, tile):
    """offsets: 9 static flat shifts (ky*Wp + kx); tile: lanes per grid step."""

    def kernel(xa_ref, xb_ref, w_ref, b_ref, wh_ref, bh_ref, o_ref):
        # xa_ref : (1, Cinp, tile)  current spatial tile of the flat padded input (bf16)
        # xb_ref : (1, Cinp, tile)  next tile (halo source for the shifted taps)
        # w_ref  : (9, Cout, Cinp)  fused RepConvN weights, tap-major (bf16)
        # b_ref  : (Cout, 1)        fused RepConvN bias (f32)
        # wh_ref : (NCp, Cout)      head 1x1-conv weight (bf16, classes padded to 8)
        # bh_ref : (NCp, 1)         head bias (f32)
        # o_ref  : (1, NCp, tile)   output tile (f32, lane-dense stores)
        full = jnp.concatenate([xa_ref[0], xb_ref[0]], axis=-1)        # (Cinp, 2*tile)

        cout = w_ref.shape[1]
        acc = jnp.zeros((cout, tile), jnp.float32)
        # 3x3 conv == 9 shifted matmuls over the flat spatial axis, f32 accumulation.
        for i, off in enumerate(offsets):                              # static unroll
            acc = acc + jnp.dot(w_ref[i], full[:, off:off + tile],
                                preferred_element_type=jnp.float32)
        acc = acc + b_ref[...]
        y = acc * jax.nn.sigmoid(acc)                                  # SiLU (VPU+EUP)

        # head 1x1 conv over channels == matmul
        out = jnp.dot(wh_ref[...], y.astype(wh_ref.dtype),
                      preferred_element_type=jnp.float32) + bh_ref[...]
        o_ref[0] = out.astype(o_ref.dtype)

    return kernel


def _vmem_capacity_bytes():
    try:
        cap = getattr(pltpu.get_tpu_info(), "vmem_capacity_bytes", None)
        if cap:
            return int(cap)
    except Exception:
        pass
    return 64 * 1024 * 1024     # conservative fallback (v7x-sized)


def head_forward(x_nchw, params, *, tile_hw=None):
    """x_nchw: (N, Cin, H, W) float32 -> (N, num_classes, H, W) float32."""
    w3, b3, w1, b1, wh, bh = params
    N, Cin, H, W = x_nchw.shape
    Cout = w3.shape[-1]
    NC = wh.shape[-1]
    Hp, Wp = H + 2, W + 2

    # ---- deploy-time reparameterization of RepConvN (numerically exact) ----
    #   (conv3x3(x)+b3) + (conv1x1(x)+b1) == conv3x3'(x) + (b3+b1),
    #   with the 1x1 kernel added to the 3x3 kernel's centre tap.
    # TODO(synk): RepConvN has no identity/BN-only third branch (bn=None in the
    # reference); only 3x3 + 1x1 are fused. Eval-mode BN folded into the biases.
    w3 = w3.at[1, 1].add(w1)                                           # (3,3,Cin,Cout)
    w_taps = jnp.transpose(w3, (0, 1, 3, 2)).reshape(9, Cout, Cin)     # (tap, co, ci)
    b_fused = (b3 + b1).reshape(Cout, 1).astype(jnp.float32)

    # channel padding: sublane-aligned streams (zeros, exact); classes padded to 8
    # so output stores are full sublane groups.
    Cin_p = ((Cin + 7) // 8) * 8
    NCp = ((NC + 7) // 8) * 8
    w_taps = jnp.pad(w_taps, ((0, 0), (0, 0), (0, Cin_p - Cin))).astype(jnp.bfloat16)
    wh_t = jnp.zeros((NCp, Cout), jnp.float32).at[:NC].set(wh.T).astype(jnp.bfloat16)
    bh_p = jnp.zeros((NCp, 1), jnp.float32).at[:NC, 0].set(bh.reshape(NC))

    # ---- flat-spatial bf16 input (NO im2col): pad H/W by 1, flatten once ----
    # The kernel evaluates the conv at every padded-width position of the H valid
    # rows (flat positions 0 .. H*Wp-1); the 2 junk columns per row are sliced off
    # in the wrapper (cheap, output-sized).
    xb = x_nchw.astype(jnp.bfloat16)
    xp = jnp.pad(xb, ((0, 0), (0, Cin_p - Cin), (1, 1), (1, 1)))       # (N,Cinp,Hp,Wp)
    xf = xp.reshape(N, Cin_p, Hp * Wp)

    offsets = [ky * Wp + kx for ky in range(3) for kx in range(3)]
    halo = offsets[-1]                                                 # 2*Wp + 2
    L_valid = H * Wp

    # ---- generation-aware tile sizing over the flat spatial (lane) axis ----
    budget = (_vmem_capacity_bytes() * 4) // 5        # ~51 MiB v7x, ~102 MiB v5e/v6e
    bytes_per_lane = (2 * (Cin_p * 2) * 2             # two input views, double-buffered
                      + 2 * (NCp * 4)                 # output, double-buffered
                      + 2 * Cin_p * 2                 # in-kernel halo concat (Cinp, 2T)
                      + 2 * Cin_p * 2                 # live shifted tap slices
                      + Cout * 4 + Cout * 2 + NCp * 4)  # acc f32 / y bf16 / out f32
    w_bytes = 2 * (9 * Cout * Cin_p * 2 + Cout * 4 + NCp * Cout * 2 + NCp * 4)
    headroom = 2 * 1024 * 1024

    tile_min = ((halo + 127) // 128) * 128            # halo must fit inside block t+1
    tile_cap = ((L_valid + 127) // 128) * 128         # no point exceeding the image
    if tile_hw is None:
        tile = max(128, ((budget - w_bytes - headroom) // bytes_per_lane) // 128 * 128)
        tile = max(tile_min, min(tile, tile_cap))
    else:
        tile = max(tile_min, ((int(tile_hw) + 127) // 128) * 128)

    n_tiles = -(-L_valid // tile)
    # megacore guard: v7x shards "parallel" grid axes across 2 TensorCores
    if N * n_tiles < 2:
        half = max(tile_min, ((tile // 2 + 127) // 128) * 128)
        if half < tile:
            tile = half
            n_tiles = -(-L_valid // tile)

    L = n_tiles * tile
    # pad the flat axis to (n_tiles + 1) * tile so the halo view (block t+1) always
    # exists; valid outputs never read the padding (exact).
    xf = jnp.pad(xf, ((0, 0), (0, 0), (0, L + tile - Hp * Wp)))

    cost = pl.CostEstimate(
        flops=2 * N * H * W * (9 * Cin * Cout + Cout * NC),            # true work only
        transcendentals=N * H * W * Cout,                              # sigmoid (SiLU)
        bytes_accessed=(2 * xf.size * 2 + w_taps.size * 2 + wh_t.size * 2
                        + N * NCp * L * 4),
    )

    kernel = _make_head_kernel(offsets, tile)
    out_flat = pl.pallas_call(
        kernel,
        out_shape=jax.ShapeDtypeStruct((N, NCp, L), jnp.float32),
        grid_spec=pltpu.PrefetchScalarGridSpec(
            num_scalar_prefetch=0,
            grid=(N, n_tiles),
            in_specs=[
                pl.BlockSpec((1, Cin_p, tile), lambda n, t: (n, 0, t)),      # tile t
                pl.BlockSpec((1, Cin_p, tile), lambda n, t: (n, 0, t + 1)),  # halo t+1
                pl.BlockSpec((9, Cout, Cin_p), lambda n, t: (0, 0, 0)),
                pl.BlockSpec((Cout, 1), lambda n, t: (0, 0)),
                pl.BlockSpec((NCp, Cout), lambda n, t: (0, 0)),
                pl.BlockSpec((NCp, 1), lambda n, t: (0, 0)),
            ],
            out_specs=pl.BlockSpec((1, NCp, tile), lambda n, t: (n, 0, t)),
        ),
        compiler_params=pltpu.CompilerParams(
            dimension_semantics=("parallel", "parallel"),
            vmem_limit_bytes=int(budget),
        ),
        cost_estimate=cost,
    )(xf, xf, w_taps, b_fused, wh_t, bh_p)

    # drop padded classes, padded flat positions and the 2 junk columns per row
    out = out_flat[:, :NC, :L_valid].reshape(N, NC, H, Wp)[:, :, :, :W]
    return out.astype(x_nchw.dtype)


def head_reference(x, params):
    """Pure-JAX f32 reference (unfused branches) for validation."""
    w3, b3, w1, b1, wh, bh = params
    N, Cin, H, W = x.shape
    xp = jnp.pad(x, ((0, 0), (0, 0), (1, 1), (1, 1)))
    y = jnp.zeros((N, w3.shape[-1], H, W), jnp.float32)
    for ky in range(3):
        for kx in range(3):
            patch = xp[:, :, ky:ky + H, kx:kx + W]
            y = y + jnp.einsum('nchw,cd->ndhw', patch, w3[ky, kx])
    y = y + jnp.einsum('nchw,cd->ndhw', x, w1)                         # 1x1 branch
    y = y + (b3 + b1).reshape(1, -1, 1, 1)
    y = y * jax.nn.sigmoid(y)                                          # SiLU
    return jnp.einsum('nchw,cd->ndhw', y, wh) + bh.reshape(1, -1, 1, 1)


def init_params(key, in_channels, out_channels, num_classes):
    """Deterministic synthetic init (shapes follow the PyTorch module)."""
    k = jax.random.split(key, 6)
    w3 = jax.random.normal(k[0], (3, 3, in_channels, out_channels), jnp.float32) * 0.1
    b3 = jax.random.normal(k[1], (1, out_channels), jnp.float32) * 0.05   # folded BN
    w1 = jax.random.normal(k[2], (in_channels, out_channels), jnp.float32) * 0.1
    b1 = jax.random.normal(k[3], (1, out_channels), jnp.float32) * 0.05   # folded BN
    wh = jax.random.normal(k[4], (out_channels, num_classes), jnp.float32) * 0.1
    bh = jax.random.normal(k[5], (1, num_classes), jnp.float32) * 0.05
    return (w3, b3, w1, b1, wh, bh)


if __name__ == "__main__":
    # small shapes consistent with the module
    N, Cin, H, W = 2, 4, 16, 16
    Cout, NUM_CLASSES = 32, 8

    key = jax.random.PRNGKey(0)
    kx_, kp_ = jax.random.split(key)
    x = jax.random.normal(kx_, (N, Cin, H, W), jnp.float32)
    params = init_params(kp_, Cin, Cout, NUM_CLASSES)

    out = head_forward(x, params)
    jax.block_until_ready(out)
    assert out.shape == (N, NUM_CLASSES, H, W)

    # loose tolerance: kernel streams inputs/weights in bf16 (f32 accumulation)
    ref = head_reference(x, params)
    err = float(jnp.max(jnp.abs(out - ref)))
    assert err < 1e-1, f"max abs err {err}"

    # TODO(synk): training-mode BatchNorm statistics update has no kernel equivalent;
    # BN is folded as identity (eval-mode semantics) into the branch biases.
    print("KERNEL_OK")
</pallas_src>

<mosaic_0001>
module attributes {stable_mosaic.version = 11 : i64} {
  func.func @kernel(%arg0: i32, %arg1: i32, %arg2: memref<1x8x384xbf16, #tpu.memory_space<vmem>>, %arg3: memref<1x8x384xbf16, #tpu.memory_space<vmem>>, %arg4: memref<9x32x8xbf16, #tpu.memory_space<vmem>>, %arg5: memref<32x1xf32, #tpu.memory_space<vmem>>, %arg6: memref<8x32xbf16, #tpu.memory_space<vmem>>, %arg7: memref<8x1xf32, #tpu.memory_space<vmem>>, %arg8: memref<1x8x384xf32, #tpu.memory_space<vmem>>) attributes {dimension_semantics = [#tpu.dimension_semantics<parallel>, #tpu.dimension_semantics<parallel>], iteration_bounds = array<i64: 2, 1>, scalar_prefetch = 0 : i64, scratch_operands = 0 : i64, tpu.core_type = #tpu.core_type<tc>, window_params = [{transform_indices = @transform_0, window_bounds = array<i64: 1, 8, 384>}, {transform_indices = @transform_1, window_bounds = array<i64: 1, 8, 384>}, {pipeline_mode = #tpu.pipeline_mode<synchronous>, transform_indices = @transform_2, window_bounds = array<i64: 9, 32, 8>}, {pipeline_mode = #tpu.pipeline_mode<synchronous>, transform_indices = @transform_3, window_bounds = array<i64: 32, 1>}, {pipeline_mode = #tpu.pipeline_mode<synchronous>, transform_indices = @transform_4, window_bounds = array<i64: 8, 32>}, {pipeline_mode = #tpu.pipeline_mode<synchronous>, transform_indices = @transform_5, window_bounds = array<i64: 8, 1>}, {transform_indices = @transform_6, window_bounds = array<i64: 1, 8, 384>}]} {
    %c0 = arith.constant 0 : index
    %c0_0 = arith.constant 0 : index
    %c0_1 = arith.constant 0 : index
    %0 = vector.load %arg2[%c0, %c0_0, %c0_1] : memref<1x8x384xbf16, #tpu.memory_space<vmem>>, vector<1x8x384xbf16>
    %1 = vector.shape_cast %0 : vector<1x8x384xbf16> to vector<8x384xbf16>
    %c0_2 = arith.constant 0 : index
    %c0_3 = arith.constant 0 : index
    %c0_4 = arith.constant 0 : index
    %2 = vector.load %arg3[%c0_2, %c0_3, %c0_4] : memref<1x8x384xbf16, #tpu.memory_space<vmem>>, vector<1x8x384xbf16>
    %3 = vector.shape_cast %2 : vector<1x8x384xbf16> to vector<8x384xbf16>
    %4 = tpu.concatenate %1, %3 in 1 : vector<8x384xbf16>, vector<8x384xbf16> -> vector<8x768xbf16>
    %cst = arith.constant 0.000000e+00 : f32
    %5 = vector.broadcast %cst : f32 to vector<32x384xf32>
    %c0_5 = arith.constant 0 : index
    %c0_6 = arith.constant 0 : index
    %c0_7 = arith.constant 0 : index
    %6 = vector.load %arg4[%c0_5, %c0_6, %c0_7] : memref<9x32x8xbf16, #tpu.memory_space<vmem>>, vector<1x32x8xbf16>
    %7 = vector.shape_cast %6 : vector<1x32x8xbf16> to vector<32x8xbf16>
    %8 = vector.extract_strided_slice %4 {offsets = [0, 0], sizes = [8, 384], strides = [1, 1]} : vector<8x768xbf16> to vector<8x384xbf16>
    %cst_8 = arith.constant dense<0.000000e+00> : vector<32x384xf32>
    %9 = tpu.matmul %7, %8, %cst_8 {dimension_numbers = #tpu.dot_dimension_numbers<[1], [0], [0], [1], [0, 0, 1, 1], [], []>} : vector<32x8xbf16>, vector<8x384xbf16>, vector<32x384xf32> -> vector<32x384xf32>
    %10 = arith.addf %5, %9 : vector<32x384xf32>
    %c1 = arith.constant 1 : index
    %c0_9 = arith.constant 0 : index
    %c0_10 = arith.constant 0 : index
    %11 = vector.load %arg4[%c1, %c0_9, %c0_10] : memref<9x32x8xbf16, #tpu.memory_space<vmem>>, vector<1x32x8xbf16>
    %12 = vector.shape_cast %11 : vector<1x32x8xbf16> to vector<32x8xbf16>
    %13 = vector.extract_strided_slice %4 {offsets = [0, 1], sizes = [8, 384], strides = [1, 1]} : vector<8x768xbf16> to vector<8x384xbf16>
    %cst_11 = arith.constant dense<0.000000e+00> : vector<32x384xf32>
    %14 = tpu.matmul %12, %13, %cst_11 {dimension_numbers = #tpu.dot_dimension_numbers<[1], [0], [0], [1], [0, 0, 1, 1], [], []>} : vector<32x8xbf16>, vector<8x384xbf16>, vector<32x384xf32> -> vector<32x384xf32>
    %15 = arith.addf %10, %14 : vector<32x384xf32>
    %c2 = arith.constant 2 : index
    %c0_12 = arith.constant 0 : index
    %c0_13 = arith.constant 0 : index
    %16 = vector.load %arg4[%c2, %c0_12, %c0_13] : memref<9x32x8xbf16, #tpu.memory_space<vmem>>, vector<1x32x8xbf16>
    %17 = vector.shape_cast %16 : vector<1x32x8xbf16> to vector<32x8xbf16>
    %18 = vector.extract_strided_slice %4 {offsets = [0, 2], sizes = [8, 384], strides = [1, 1]} : vector<8x768xbf16> to vector<8x384xbf16>
    %cst_14 = arith.constant dense<0.000000e+00> : vector<32x384xf32>
    %19 = tpu.matmul %17, %18, %cst_14 {dimension_numbers = #tpu.dot_dimension_numbers<[1], [0], [0], [1], [0, 0, 1, 1], [], []>} : vector<32x8xbf16>, vector<8x384xbf16>, vector<32x384xf32> -> vector<32x384xf32>
    %20 = arith.addf %15, %19 : vector<32x384xf32>
    %c3 = arith.constant 3 : index
    %c0_15 = arith.constant 0 : index
    %c0_16 = arith.constant 0 : index
    %21 = vector.load %arg4[%c3, %c0_15, %c0_16] : memref<9x32x8xbf16, #tpu.memory_space<vmem>>, vector<1x32x8xbf16>
    %22 = vector.shape_cast %21 : vector<1x32x8xbf16> to vector<32x8xbf16>
    %23 = vector.extract_strided_slice %4 {offsets = [0, 18], sizes = [8, 384], strides = [1, 1]} : vector<8x768xbf16> to vector<8x384xbf16>
    %cst_17 = arith.constant dense<0.000000e+00> : vector<32x384xf32>
    %24 = tpu.matmul %22, %23, %cst_17 {dimension_numbers = #tpu.dot_dimension_numbers<[1], [0], [0], [1], [0, 0, 1, 1], [], []>} : vector<32x8xbf16>, vector<8x384xbf16>, vector<32x384xf32> -> vector<32x384xf32>
    %25 = arith.addf %20, %24 : vector<32x384xf32>
    %c4 = arith.constant 4 : index
    %c0_18 = arith.constant 0 : index
    %c0_19 = arith.constant 0 : index
    %26 = vector.load %arg4[%c4, %c0_18, %c0_19] : memref<9x32x8xbf16, #tpu.memory_space<vmem>>, vector<1x32x8xbf16>
    %27 = vector.shape_cast %26 : vector<1x32x8xbf16> to vector<32x8xbf16>
    %28 = vector.extract_strided_slice %4 {offsets = [0, 19], sizes = [8, 384], strides = [1, 1]} : vector<8x768xbf16> to vector<8x384xbf16>
    %cst_20 = arith.constant dense<0.000000e+00> : vector<32x384xf32>
    %29 = tpu.matmul %27, %28, %cst_20 {dimension_numbers = #tpu.dot_dimension_numbers<[1], [0], [0], [1], [0, 0, 1, 1], [], []>} : vector<32x8xbf16>, vector<8x384xbf16>, vector<32x384xf32> -> vector<32x384xf32>
    %30 = arith.addf %25, %29 : vector<32x384xf32>
    %c5 = arith.constant 5 : index
    %c0_21 = arith.constant 0 : index
    %c0_22 = arith.constant 0 : index
    %31 = vector.load %arg4[%c5, %c0_21, %c0_22] : memref<9x32x8xbf16, #tpu.memory_space<vmem>>, vector<1x32x8xbf16>
    %32 = vector.shape_cast %31 : vector<1x32x8xbf16> to vector<32x8xbf16>
    %33 = vector.extract_strided_slice %4 {offsets = [0, 20], sizes = [8, 384], strides = [1, 1]} : vector<8x768xbf16> to vector<8x384xbf16>
    %cst_23 = arith.constant dense<0.000000e+00> : vector<32x384xf32>
    %34 = tpu.matmul %32, %33, %cst_23 {dimension_numbers = #tpu.dot_dimension_numbers<[1], [0], [0], [1], [0, 0, 1, 1], [], []>} : vector<32x8xbf16>, vector<8x384xbf16>, vector<32x384xf32> -> vector<32x384xf32>
    %35 = arith.addf %30, %34 : vector<32x384xf32>
    %c6 = arith.constant 6 : index
    %c0_24 = arith.constant 0 : index
    %c0_25 = arith.constant 0 : index
    %36 = vector.load %arg4[%c6, %c0_24, %c0_25] : memref<9x32x8xbf16, #tpu.memory_space<vmem>>, vector<1x32x8xbf16>
    %37 = vector.shape_cast %36 : vector<1x32x8xbf16> to vector<32x8xbf16>
    %38 = vector.extract_strided_slice %4 {offsets = [0, 36], sizes = [8, 384], strides = [1, 1]} : vector<8x768xbf16> to vector<8x384xbf16>
    %cst_26 = arith.constant dense<0.000000e+00> : vector<32x384xf32>
    %39 = tpu.matmul %37, %38, %cst_26 {dimension_numbers = #tpu.dot_dimension_numbers<[1], [0], [0], [1], [0, 0, 1, 1], [], []>} : vector<32x8xbf16>, vector<8x384xbf16>, vector<32x384xf32> -> vector<32x384xf32>
    %40 = arith.addf %35, %39 : vector<32x384xf32>
    %c7 = arith.constant 7 : index
    %c0_27 = arith.constant 0 : index
    %c0_28 = arith.constant 0 : index
    %41 = vector.load %arg4[%c7, %c0_27, %c0_28] : memref<9x32x8xbf16, #tpu.memory_space<vmem>>, vector<1x32x8xbf16>
    %42 = vector.shape_cast %41 : vector<1x32x8xbf16> to vector<32x8xbf16>
    %43 = vector.extract_strided_slice %4 {offsets = [0, 37], sizes = [8, 384], strides = [1, 1]} : vector<8x768xbf16> to vector<8x384xbf16>
    %cst_29 = arith.constant dense<0.000000e+00> : vector<32x384xf32>
    %44 = tpu.matmul %42, %43, %cst_29 {dimension_numbers = #tpu.dot_dimension_numbers<[1], [0], [0], [1], [0, 0, 1, 1], [], []>} : vector<32x8xbf16>, vector<8x384xbf16>, vector<32x384xf32> -> vector<32x384xf32>
    %45 = arith.addf %40, %44 : vector<32x384xf32>
    %c8 = arith.constant 8 : index
    %c0_30 = arith.constant 0 : index
    %c0_31 = arith.constant 0 : index
    %46 = vector.load %arg4[%c8, %c0_30, %c0_31] : memref<9x32x8xbf16, #tpu.memory_space<vmem>>, vector<1x32x8xbf16>
    %47 = vector.shape_cast %46 : vector<1x32x8xbf16> to vector<32x8xbf16>
    %48 = vector.extract_strided_slice %4 {offsets = [0, 38], sizes = [8, 384], strides = [1, 1]} : vector<8x768xbf16> to vector<8x384xbf16>
    %cst_32 = arith.constant dense<0.000000e+00> : vector<32x384xf32>
    %49 = tpu.matmul %47, %48, %cst_32 {dimension_numbers = #tpu.dot_dimension_numbers<[1], [0], [0], [1], [0, 0, 1, 1], [], []>} : vector<32x8xbf16>, vector<8x384xbf16>, vector<32x384xf32> -> vector<32x384xf32>
    %50 = arith.addf %45, %49 : vector<32x384xf32>
    %c0_33 = arith.constant 0 : index
    %c0_34 = arith.constant 0 : index
    %51 = vector.load %arg5[%c0_33, %c0_34] : memref<32x1xf32, #tpu.memory_space<vmem>>, vector<32x1xf32>
    %52 = vector.broadcast %51 : vector<32x1xf32> to vector<32x384xf32>
    %53 = arith.addf %50, %52 : vector<32x384xf32>
    %54 = arith.negf %53 : vector<32x384xf32>
    %55 = math.exp %54 : vector<32x384xf32>
    %cst_35 = arith.constant 1.000000e+00 : f32
    %56 = vector.broadcast %cst_35 : f32 to vector<32x384xf32>
    %57 = arith.addf %56, %55 : vector<32x384xf32>
    %58 = arith.divf %56, %57 : vector<32x384xf32>
    %59 = arith.mulf %53, %58 : vector<32x384xf32>
    %c0_36 = arith.constant 0 : index
    %c0_37 = arith.constant 0 : index
    %60 = vector.load %arg6[%c0_36, %c0_37] : memref<8x32xbf16, #tpu.memory_space<vmem>>, vector<8x32xbf16>
    %61 = arith.truncf %59 : vector<32x384xf32> to vector<32x384xbf16>
    %cst_38 = arith.constant dense<0.000000e+00> : vector<8x384xf32>
    %62 = tpu.matmul %60, %61, %cst_38 {dimension_numbers = #tpu.dot_dimension_numbers<[1], [0], [0], [1], [0, 0, 1, 1], [], []>} : vector<8x32xbf16>, vector<32x384xbf16>, vector<8x384xf32> -> vector<8x384xf32>
    %c0_39 = arith.constant 0 : index
    %c0_40 = arith.constant 0 : index
    %63 = vector.load %arg7[%c0_39, %c0_40] : memref<8x1xf32, #tpu.memory_space<vmem>>, vector<8x1xf32>
    %64 = vector.broadcast %63 : vector<8x1xf32> to vector<8x384xf32>
    %65 = arith.addf %62, %64 : vector<8x384xf32>
    %c0_41 = arith.constant 0 : index
    %c0_42 = arith.constant 0 : index
    %c0_43 = arith.constant 0 : index
    %66 = vector.load %arg8[%c0_41, %c0_42, %c0_43] : memref<1x8x384xf32, #tpu.memory_space<vmem>>, vector<1x8x384xf32>
    %67 = vector.shape_cast %66 : vector<1x8x384xf32> to vector<8x384xf32>
    %68 = vector.shape_cast %65 : vector<8x384xf32> to vector<1x8x384xf32>
    tpu.vector_store %arg8[%c0_41, %c0_42, %c0_43], %68 {strides = array<i32>} : memref<1x8x384xf32, #tpu.memory_space<vmem>>, vector<1x8x384xf32>,
    return
  }
  func.func @transform_0(%arg0: i32, %arg1: i32) -> (i32, i32, i32) {
    %c0_i32 = arith.constant 0 : i32
    %c0_i32_0 = arith.constant 0 : i32
    return %arg0, %c0_i32, %arg1 : i32, i32, i32
  }
  func.func @transform_1(%arg0: i32, %arg1: i32) -> (i32, i32, i32) {
    %c1_i32 = arith.constant 1 : i32
    %0 = arith.addi %arg1, %c1_i32 : i32
    %c0_i32 = arith.constant 0 : i32
    %c0_i32_0 = arith.constant 0 : i32
    return %arg0, %c0_i32, %0 : i32, i32, i32
  }
  func.func @transform_2(%arg0: i32, %arg1: i32) -> (i32, i32, i32) {
    %c0_i32 = arith.constant 0 : i32
    %c0_i32_0 = arith.constant 0 : i32
    %c0_i32_1 = arith.constant 0 : i32
    %c0_i32_2 = arith.constant 0 : i32
    return %c0_i32, %c0_i32_0, %c0_i32_1 : i32, i32, i32
  }
  func.func @transform_3(%arg0: i32, %arg1: i32) -> (i32, i32) {
    %c0_i32 = arith.constant 0 : i32
    %c0_i32_0 = arith.constant 0 : i32
    %c0_i32_1 = arith.constant 0 : i32
    return %c0_i32, %c0_i32_0 : i32, i32
  }
  func.func @transform_4(%arg0: i32, %arg1: i32) -> (i32, i32) {
    %c0_i32 = arith.constant 0 : i32
    %c0_i32_0 = arith.constant 0 : i32
    %c0_i32_1 = arith.constant 0 : i32
    return %c0_i32, %c0_i32_0 : i32, i32
  }
  func.func @transform_5(%arg0: i32, %arg1: i32) -> (i32, i32) {
    %c0_i32 = arith.constant 0 : i32
    %c0_i32_0 = arith.constant 0 : i32
    %c0_i32_1 = arith.constant 0 : i32
    return %c0_i32, %c0_i32_0 : i32, i32
  }
  func.func @transform_6(%arg0: i32, %arg1: i32) -> (i32, i32, i32) {
    %c0_i32 = arith.constant 0 : i32
    %c0_i32_0 = arith.constant 0 : i32
    return %arg0, %c0_i32, %arg1 : i32, i32, i32
  }
}

</mosaic_0001>

<llo_original>
// kernel: tpu_custom_call.1
$region0: #{tpu_custom_call.1}
  #allocation0 [shape = 'u32[]', space=smem, size = 0x4, offset = 0x4, fixed_abs, tag = 'smem constant byte address 0x4 - core index']
  #allocation1 [shape = 'u32[72,128]{1,0:T(1,128)}', space=vmem, size = 0x9000, scoped, tag = 'internal scratch']
  %s0 = inlined_call_operand.vmem [shape: bf16[2,8,768], index: 0, kind: input, shape index: {}]
  %s1 = inlined_call_operand.vmem [shape: bf16[2,8,768], index: 1, kind: input, shape index: {}]
  %s2 = inlined_call_operand.vmem [shape: bf16[9,32,8], index: 2, kind: input, shape index: {}]
  %s3 = inlined_call_operand.vmem [shape: f32[32,1], index: 3, kind: input, shape index: {}]
  %s4 = inlined_call_operand.vmem [shape: bf16[8,32], index: 4, kind: input, shape index: {}]
  %s5 = inlined_call_operand.vmem [shape: f32[8,1], index: 5, kind: input, shape index: {}]
  %s6 = inlined_call_operand.hbm [shape: f32[2,8,384], index: 6, kind: output, shape index: {}]
  %s7 = sld [smem:[#allocation0]]
  $region57: #{tpu_custom_call.1} parent=0
    _
  %s9 = ssub.s32 1, %s7
  %s10 = scalar_select 0, %s9, %s7
  $region1: #{tpu_custom_call.1} parent=0
    #allocation2 [shape = 'u8[24576]{0}', space=vmem, size = 0x6000, scoped, tag = 'output window, operand 0']
    #allocation3 [shape = 's32[2]{0}', space=sflag, size = 0x8, scoped, tag = 'scoped memory for tpu_custom_call.1']
    %11 = vsyncpa [#allocation3], 0
    %s12 = scalar_lea.sflag [#allocation3], 1
    %13 = vsyncpa %s12, 0
    loop: start=0, step=1, limit=4
    $region2: #{tpu_custom_call.1} parent=1 // loop_pre_header
      _
    $region3: #{tpu_custom_call.1} parent=1 // loop_header
      %s15 = sphi 0, %s19
      %p16 = scmp.ge.s32.totalorder %s15, 4
      %s22 = sphi 0, %s34
      %s23 = sphi 0, %s30
      %s24 = sphi 0, %s22
      %s25 = sphi 0, %s23
      %s26 = sphi 0, %s24
      %s27 = sphi 0, %s25
      %s39 = sphi 0, %s41
      %s42 = sphi 0, %s39
      %s43 = sphi 0, %s42
      %s59 = sphi 0, %s43
      %s69 = sphi 0, %s71
      %s72 = sphi 0, %s69
      %s73 = sphi 0, %s72
      %s89 = sphi 0, %s73
      %s93 = sphi 0, %s93
      %s95 = sphi 0, %s93
      %s96 = sphi 0, %s95
      %s110 = sphi 0, %s96
      %s114 = sphi 0, %s114
      %s116 = sphi 0, %s114
      %s117 = sphi 0, %s116
      %s131 = sphi 0, %s117
      %s135 = sphi 0, %s135
      %s137 = sphi 0, %s135
      %s138 = sphi 0, %s137
      %s152 = sphi 0, %s138
      %s156 = sphi 0, %s156
      %s158 = sphi 0, %s156
      %s159 = sphi 0, %s158
      %s173 = sphi 0, %s159
      %s181 = sphi 0, %s183
      %s184 = sphi 0, %s181
      %s185 = sphi 0, %s184
      %s201 = sphi 0, %s185
    $region4: #{tpu_custom_call.1} parent=1 // loop_header_branch
      %18 = sbr.rel (%p16) target = $region8
    $region5: #{tpu_custom_call.1} parent=1 // loop_body
      %s20 = ssub.s32 %s15, 1
      %s21 = ssub.s32 %s15, 2
      %s28 = sadd.s32 1, %s23
      %p29 = scmp.ge.s32.totalorder %s28, 1
      %s30 = scalar_select %p29, 0, %s28
      %s31 = sadd.s32 1, %s22
      %s32 = scalar_select %p29, %s31, %s22
      %p33 = scmp.ge.s32.totalorder %s32, 2
      %s34 = scalar_select %p33, 0, %s32
      %s35 = ssub.s32 %s22, %s34
      %s36 = ssub.s32 %s23, %s30
      %s37 = sor.u32 %s35, %s36
      %p38 = scmp.eq.s32.totalorder %s37, 0
      %s40 = sadd.s32 %s39, 1
      %s41 = scalar_select %p38, %s39, %s40
      %p44 = pneg %p38
      %p45 = scmp.eq.s32.totalorder %s15, 1
      %p46 = por %p44, %p45
      %p47 = scmp.ne.s32.totalorder %s39, %s42
      %p48 = scmp.eq.s32.totalorder %s15, 0
      %p49 = por %p47, %p48
      %p50 = scmp.ne.s32.totalorder %s39, %s42
      %p51 = scmp.eq.s32.totalorder %s20, 1
      %p52 = por %p50, %p51
      %p53 = scmp.ne.s32.totalorder %s42, %s43
      %p54 = scmp.eq.s32.totalorder %s20, 0
      %p55 = por %p53, %p54
      %p56 = scmp.ne.s32.totalorder %s42, %s43
      %p57 = scmp.eq.s32.totalorder %s21, 1
      %p58 = por %p56, %p57
      %p60 = scmp.ne.s32.totalorder %s43, %s59
      %p61 = scmp.eq.s32.totalorder %s21, 0
      %p62 = por %p60, %p61
      %s63 = sadd.s32 %s23, 1
      %s64 = sadd.s32 %s30, 1
      %s65 = ssub.s32 %s22, %s34
      %s66 = ssub.s32 %s63, %s64
      %s67 = sor.u32 %s65, %s66
      %p68 = scmp.eq.s32.totalorder %s67, 0
      %s70 = sadd.s32 %s69, 1
      %s71 = scalar_select %p68, %s69, %s70
      %p74 = pneg %p68
      %p75 = scmp.eq.s32.totalorder %s15, 1
      %p76 = por %p74, %p75
      %p77 = scmp.ne.s32.totalorder %s69, %s72
      %p78 = scmp.eq.s32.totalorder %s15, 0
      %p79 = por %p77, %p78
      %p80 = scmp.ne.s32.totalorder %s69, %s72
      %p81 = scmp.eq.s32.totalorder %s20, 1
      %p82 = por %p80, %p81
      %p83 = scmp.ne.s32.totalorder %s72, %s73
      %p84 = scmp.eq.s32.totalorder %s20, 0
      %p85 = por %p83, %p84
      %p86 = scmp.ne.s32.totalorder %s72, %s73
      %p87 = scmp.eq.s32.totalorder %s21, 1
      %p88 = por %p86, %p87
      %p90 = scmp.ne.s32.totalorder %s73, %s89
      %p91 = scmp.eq.s32.totalorder %s21, 0
      %p92 = por %p90, %p91
      %s94 = sadd.s32 %s93, 1
      %p97 = scmp.eq.s32.totalorder %s15, 1
      %p98 = scmp.ne.s32.totalorder %s93, %s95
      %p99 = scmp.eq.s32.totalorder %s15, 0
      %p100 = por %p98, %p99
      %p101 = scmp.ne.s32.totalorder %s93, %s95
      %p102 = scmp.eq.s32.totalorder %s20, 1
      %p103 = por %p101, %p102
      %p104 = scmp.ne.s32.totalorder %s95, %s96
      %p105 = scmp.eq.s32.totalorder %s20, 0
      %p106 = por %p104, %p105
      %p107 = scmp.ne.s32.totalorder %s95, %s96
      %p108 = scmp.eq.s32.totalorder %s21, 1
      %p109 = por %p107, %p108
      %p111 = scmp.ne.s32.totalorder %s96, %s110
      %p112 = scmp.eq.s32.totalorder %s21, 0
      %p113 = por %p111, %p112
      %s115 = sadd.s32 %s114, 1
      %p118 = scmp.eq.s32.totalorder %s15, 1
      %p119 = scmp.ne.s32.totalorder %s114, %s116
      %p120 = scmp.eq.s32.totalorder %s15, 0
      %p121 = por %p119, %p120
      %p122 = scmp.ne.s32.totalorder %s114, %s116
      %p123 = scmp.eq.s32.totalorder %s20, 1
      %p124 = por %p122, %p123
      %p125 = scmp.ne.s32.totalorder %s116, %s117
      %p126 = scmp.eq.s32.totalorder %s20, 0
      %p127 = por %p125, %p126
      %p128 = scmp.ne.s32.totalorder %s116, %s117
      %p129 = scmp.eq.s32.totalorder %s21, 1
      %p130 = por %p128, %p129
      %p132 = scmp.ne.s32.totalorder %s117, %s131
      %p133 = scmp.eq.s32.totalorder %s21, 0
      %p134 = por %p132, %p133
      %s136 = sadd.s32 %s135, 1
      %p139 = scmp.eq.s32.totalorder %s15, 1
      %p140 = scmp.ne.s32.totalorder %s135, %s137
      %p141 = scmp.eq.s32.totalorder %s15, 0
      %p142 = por %p140, %p141
      %p143 = scmp.ne.s32.totalorder %s135, %s137
      %p144 = scmp.eq.s32.totalorder %s20, 1
      %p145 = por %p143, %p144
      %p146 = scmp.ne.s32.totalorder %s137, %s138
      %p147 = scmp.eq.s32.totalorder %s20, 0
      %p148 = por %p146, %p147
      %p149 = scmp.ne.s32.totalorder %s137, %s138
      %p150 = scmp.eq.s32.totalorder %s21, 1
      %p151 = por %p149, %p150
      %p153 = scmp.ne.s32.totalorder %s138, %s152
      %p154 = scmp.eq.s32.totalorder %s21, 0
      %p155 = por %p153, %p154
      %s157 = sadd.s32 %s156, 1
      %p160 = scmp.eq.s32.totalorder %s15, 1
      %p161 = scmp.ne.s32.totalorder %s156, %s158
      %p162 = scmp.eq.s32.totalorder %s15, 0
      %p163 = por %p161, %p162
      %p164 = scmp.ne.s32.totalorder %s156, %s158
      %p165 = scmp.eq.s32.totalorder %s20, 1
      %p166 = por %p164, %p165
      %p167 = scmp.ne.s32.totalorder %s158, %s159
      %p168 = scmp.eq.s32.totalorder %s20, 0
      %p169 = por %p167, %p168
      %p170 = scmp.ne.s32.totalorder %s158, %s159
      %p171 = scmp.eq.s32.totalorder %s21, 1
      %p172 = por %p170, %p171
      %p174 = scmp.ne.s32.totalorder %s159, %s173
      %p175 = scmp.eq.s32.totalorder %s21, 0
      %p176 = por %p174, %p175
      %s177 = ssub.s32 %s22, %s34
      %s178 = ssub.s32 %s23, %s30
      %s179 = sor.u32 %s177, %s178
      %p180 = scmp.eq.s32.totalorder %s179, 0
      %s182 = sadd.s32 %s181, 1
      %s183 = scalar_select %p180, %s181, %s182
      %p186 = pneg %p180
      %p187 = scmp.eq.s32.totalorder %s15, 1
      %p188 = por %p186, %p187
      %p189 = scmp.ne.s32.totalorder %s181, %s184
      %p190 = scmp.eq.s32.totalorder %s15, 0
      %p191 = por %p189, %p190
      %p192 = scmp.ne.s32.totalorder %s181, %s184
      %p193 = scmp.eq.s32.totalorder %s20, 1
      %p194 = por %p192, %p193
      %p195 = scmp.ne.s32.totalorder %s184, %s185
      %p196 = scmp.eq.s32.totalorder %s20, 0
      %p197 = por %p195, %p196
      %p198 = scmp.ne.s32.totalorder %s184, %s185
      %p199 = scmp.eq.s32.totalorder %s21, 1
      %p200 = por %p198, %p199
      %p202 = scmp.ne.s32.totalorder %s185, %s201
      %p203 = scmp.eq.s32.totalorder %s21, 0
      %p204 = por %p202, %p203
      %p205 = scmp.le.s32.totalorder 1, %s15
      %p206 = scmp.lt.s32.totalorder %s15, 3
      %p207 = pnand %p205, %p206
      %p208 = pneg %p207
      // Predicated region
      $region9: #{tpu_custom_call.1} parent=5 // pred_check
        _
      $region10: #{tpu_custom_call.1} parent=5 // pred_check_branch
        %210 = sbr.rel (%p207) target = $region12
      $region11: #{tpu_custom_call.1} parent=5 // pred_region
        %s211 = ssub.s32 %s15, 1
        // Predicated region
        $region13: #{tpu_custom_call.1} parent=11 // pred_check
          %p212 = pneg %p106
        $region14: #{tpu_custom_call.1} parent=11 // pred_check_branch
          %214 = sbr.rel (%p212) target = $region16
        $region15: #{tpu_custom_call.1} parent=11 // pred_region
          _
        $region16: #{tpu_custom_call.1} parent=11 // pred_fallthru
          _
        // Predicated region
        $region17: #{tpu_custom_call.1} parent=11 // pred_check
          %p215 = pneg %p127
        $region18: #{tpu_custom_call.1} parent=11 // pred_check_branch
          %217 = sbr.rel (%p215) target = $region20
        $region19: #{tpu_custom_call.1} parent=11 // pred_region
          _
        $region20: #{tpu_custom_call.1} parent=11 // pred_fallthru
          _
        // Predicated region
        $region21: #{tpu_custom_call.1} parent=11 // pred_check
          %p218 = pneg %p148
        $region22: #{tpu_custom_call.1} parent=11 // pred_check_branch
          %220 = sbr.rel (%p218) target = $region24
        $region23: #{tpu_custom_call.1} parent=11 // pred_region
          _
        $region24: #{tpu_custom_call.1} parent=11 // pred_fallthru
          _
        // Predicated region
        $region25: #{tpu_custom_call.1} parent=11 // pred_check
          %p221 = pneg %p169
        $region26: #{tpu_custom_call.1} parent=11 // pred_check_branch
          %223 = sbr.rel (%p221) target = $region28
        $region27: #{tpu_custom_call.1} parent=11 // pred_region
          _
        $region28: #{tpu_custom_call.1} parent=11 // pred_fallthru
          _
      $region12: #{tpu_custom_call.1} parent=5 // pred_fallthru
        _
      %p224 = scmp.lt.s32.totalorder %s15, 2
      // Predicated region
      $region29: #{tpu_custom_call.1} parent=5 // pred_check
        %p225 = pneg %p224
      $region30: #{tpu_custom_call.1} parent=5 // pred_check_branch
        %227 = sbr.rel (%p225) target = $region32
      $region31: #{tpu_custom_call.1} parent=5 // pred_region
        // Predicated region
        $region33: #{tpu_custom_call.1} parent=31 // pred_check
          %p228 = pneg %p49
        $region34: #{tpu_custom_call.1} parent=31 // pred_check_branch
          %230 = sbr.rel (%p228) target = $region36
        $region35: #{tpu_custom_call.1} parent=31 // pred_region
          %s231 = smul.u32 3, %s23
          %p232 = scmp.lt.s32.totalorder %s22, 1
          %s233 = scalar_select %p232, %s22, 1
          %p234 = scmp.lt.s32.totalorder %s231, 5
          %s235 = scalar_select %p234, %s231, 5
          %s236 = smul.addr %s233, 6
          %s237 = sadd.s32 %s235, %s236
          %s238 = smul.addr %s237, 4
          %s239 = scalar_lea.vmem %s0, %s238
          %s240 = smul.u32 3, %s23
        $region36: #{tpu_custom_call.1} parent=31 // pred_fallthru
          _
        // Predicated region
        $region37: #{tpu_custom_call.1} parent=31 // pred_check
          %p241 = pneg %p79
        $region38: #{tpu_custom_call.1} parent=31 // pred_check_branch
          %243 = sbr.rel (%p241) target = $region40
        $region39: #{tpu_custom_call.1} parent=31 // pred_region
          %s244 = sadd.s32 %s23, 1
          %s245 = smul.u32 3, %s244
          %p246 = scmp.lt.s32.totalorder %s22, 1
          %s247 = scalar_select %p246, %s22, 1
          %p248 = scmp.lt.s32.totalorder %s245, 5
          %s249 = scalar_select %p248, %s245, 5
          %s250 = smul.addr %s247, 6
          %s251 = sadd.s32 %s249, %s250
          %s252 = smul.addr %s251, 4
          %s253 = scalar_lea.vmem %s1, %s252
          %s254 = sadd.s32 %s23, 1
          %s255 = smul.u32 3, %s254
        $region40: #{tpu_custom_call.1} parent=31 // pred_fallthru
          _
      $region32: #{tpu_custom_call.1} parent=5 // pred_fallthru
        _
      %p256 = scmp.le.s32.totalorder 1, %s15
      %p257 = scmp.lt.s32.totalorder %s15, 3
      %p258 = pnand %p256, %p257
      %p259 = pneg %p258
      // Predicated region
      $region41: #{tpu_custom_call.1} parent=5 // pred_check
        _
      $region42: #{tpu_custom_call.1} parent=5 // pred_check_branch
        %261 = sbr.rel (%p258) target = $region44
      $region43: #{tpu_custom_call.1} parent=5 // pred_region
        %s262 = ssub.s32 %s15, 1
        %s263 = smul.u32 3, %s25
        %p264 = scmp.lt.s32.totalorder %s24, 1
        %s265 = scalar_select %p264, %s24, 1
        %p266 = scmp.lt.s32.totalorder %s263, 5
        %s267 = scalar_select %p266, %s263, 5
        %s268 = smul.addr %s265, 6
        %s269 = sadd.s32 %s267, %s268
        %s270 = smul.addr %s269, 4
        %s271 = scalar_lea.vmem %s0, %s270
        %p272 = pneg %p55
        %p273 = pneg %p52
        %s274 = sadd.s32 %s25, 1
        %s275 = smul.u32 3, %s274
        %p276 = scmp.lt.s32.totalorder %s24, 1
        %s277 = scalar_select %p276, %s24, 1
        %p278 = scmp.lt.s32.totalorder %s275, 5
        %s279 = scalar_select %p278, %s275, 5
        %s280 = smul.addr %s277, 6
        %s281 = sadd.s32 %s279, %s280
        %s282 = smul.addr %s281, 4
        %s283 = scalar_lea.vmem %s1, %s282
        %p284 = pneg %p85
        %p285 = pneg %p82
        %p286 = pneg %p106
        %p287 = pneg %p103
        %p288 = pneg %p127
        %p289 = pneg %p124
        %p290 = pneg %p148
        %p291 = pneg %p145
        %p292 = pneg %p169
        %p293 = pneg %p166
        %p294 = pneg %p197
        %p295 = pneg %p194
        %s296 = sand.u32 %s184, 1
        %s297 = scalar_lea.sflag [#allocation3], %s296
        %s298 = sand.u32 %s184, 1
        %s299 = smul.addr %s298, 24
        %s300 = scalar_lea.vmem [#allocation2], %s299
        %s301 = smul.u32 3, %s25
        %p302 = scmp.lt.s32.totalorder %s24, 1
        %s303 = scalar_select %p302, %s24, 1
        %p304 = scmp.lt.s32.totalorder %s301, 5
        %s305 = scalar_select %p304, %s301, 5
        %s306 = smul.addr %s303, 6
        %s307 = sadd.s32 %s305, %s306
        %s308 = smul.addr %s307, 4
        %s309 = scalar_lea.vmem %s0, %s308
        %s310 = smul.u32 3, %s25
        %s311 = sadd.s32 %s25, 1
        %s312 = smul.u32 3, %s311
        %p313 = scmp.lt.s32.totalorder %s24, 1
        %s314 = scalar_select %p313, %s24, 1
        %p315 = scmp.lt.s32.totalorder %s312, 5
        %s316 = scalar_select %p315, %s312, 5
        %s317 = smul.addr %s314, 6
        %s318 = sadd.s32 %s316, %s317
        %s319 = smul.addr %s318, 4
        %s320 = scalar_lea.vmem %s1, %s319
        %s321 = sadd.s32 %s25, 1
        %s322 = smul.u32 3, %s321
        %s323 = smul.u32 3, %s25
        %v325 = vld [vmem:[%s309] sm:$0xff]
        %v326 = vld [vmem:[%s309 + $0x8] sm:$0xf]
        %v327 = vld [vmem:[%s320] sm:$0xff]
        %v330 = vunpack.c.l.b16 %v325
        %v331 = vunpack.c.h.b16 %v325
        %v332 = vunpack.c.l.b16 %v326
        %v333 = vpack.c.b16 %v330, %v330
        %v334 = vpack.c.b16 %v331, %v331
        %v335 = vpack.c.b16 %v332, %v332
        %v337 = vunpack.c.l.b16 %v327
        %v338 = vpack.c.b16 %v337, %v337
        %v339 = vld [vmem:[%s2] sm:$0xf]
        %v340 = vld [vmem:[%s2 + $0x4] sm:$0xf]
        %v341 = vld [vmem:[%s2 + $0x8] sm:$0xf]
        %v342 = vld [vmem:[%s2 + $0xc] sm:$0xf]
        %s343 = scalar_lea.vmem %s2, 16
        %v344 = vld [vmem:[%s343] sm:$0xf]
        %v345 = vld [vmem:[%s343 + $0x4] sm:$0xf]
        %v346 = vld [vmem:[%s343 + $0x8] sm:$0xf]
        %v347 = vld [vmem:[%s343 + $0xc] sm:$0xf]
        %v352 = vunpack.c.l.b16 %v344
        %v353 = vunpack.c.l.b16 %v345
        %v354 = vunpack.c.l.b16 %v346
        %v355 = vunpack.c.l.b16 %v347
        %v356 = vpack.c.b16 %v353, %v352
        %v357 = vpack.c.b16 %v355, %v354
        %358 = vrot.lane.b32.xlu0 %v333, 127
        %v359 = vpop.permute.xlu0 %358
        %360 = vrot.lane.b32.xlu0 %v334, 127
        %v361 = vpop.permute.xlu0 %360
        %362 = vrot.lane.b32.xlu0 %v335, 127
        %v363 = vpop.permute.xlu0 %362
        %364 = vrot.lane.b32.xlu0 %v338, 127
        %v365 = vpop.permute.xlu0 %364
        %vm366 = vcmask 1039360
        %v367 = vsel %vm366, %v359, %v361
        %v368 = vsel %vm366, %v361, %v363
        %v369 = vsel %vm366, %v363, %v365
        %vm370 = vcmask 64512
        %v372 = vsel %vm370, %v356, 0
        %v375 = vsel %vm370, %v357, 0
        %vm377 = vcmask 1043456
        %v379 = vsel %vm377, %v367, 0
        %v382 = vsel %vm377, %v368, 0
        %v385 = vsel %vm377, %v369, 0
        %387 = vmatpush.bf16.msra.mxu0 0
        %388 = vmatpush.bf16.msra.mxu0 0
        %389 = vmatpush.bf16.msra.mxu0 0
        %390 = vmatpush.bf16.msra.mxu0 0
        %391 = vmatpush.bf16.msra.mxu0 0
        %392 = vmatpush.bf16.msra.mxu0 0
        %393 = vmatpush.bf16.msra.mxu0 0
        %394 = vmatpush.bf16.msra.mxu0 %v379
        %395 = vmatmul.bf16.gmra.mxu0 %v372
        %v396 = vpop.f32.mrf.mxu0
        %v397 = vadd.f32 0.0, %v396
        %v398 = vpop.f32.mrf.mxu0
        %v399 = vadd.f32 0.0, %v398
        %400 = vmatmul.bf16.gmra.mxu0 %v375
        %v401 = vpop.f32.mrf.mxu0
        %v402 = vadd.f32 0.0, %v401
        %v403 = vpop.f32.mrf.mxu0
        %v404 = vadd.f32 0.0, %v403
        %405 = vdwg.mxu0
        %406 = vmatpush.bf16.msra.mxu0 0
        %407 = vmatpush.bf16.msra.mxu0 0
        %408 = vmatpush.bf16.msra.mxu0 0
        %409 = vmatpush.bf16.msra.mxu0 0
        %410 = vmatpush.bf16.msra.mxu0 0
        %411 = vmatpush.bf16.msra.mxu0 0
        %412 = vmatpush.bf16.msra.mxu0 0
        %413 = vmatpush.bf16.msra.mxu0 %v382
        %414 = vmatmul.bf16.gmra.mxu0 %v372
        %v415 = vpop.f32.mrf.mxu0
        %v416 = vadd.f32 0.0, %v415
        %v417 = vpop.f32.mrf.mxu0
        %v418 = vadd.f32 0.0, %v417
        %419 = vmatmul.bf16.gmra.mxu0 %v375
        %v420 = vpop.f32.mrf.mxu0
        %v421 = vadd.f32 0.0, %v420
        %v422 = vpop.f32.mrf.mxu0
        %v423 = vadd.f32 0.0, %v422
        %424 = vdwg.mxu0
        %425 = vmatpush.bf16.msra.mxu0 0
        %426 = vmatpush.bf16.msra.mxu0 0
        %427 = vmatpush.bf16.msra.mxu0 0
        %428 = vmatpush.bf16.msra.mxu0 0
        %429 = vmatpush.bf16.msra.mxu0 0
        %430 = vmatpush.bf16.msra.mxu0 0
        %431 = vmatpush.bf16.msra.mxu0 0
        %432 = vmatpush.bf16.msra.mxu0 %v385
        %433 = vmatmul.bf16.gmra.mxu0 %v372
        %v434 = vpop.f32.mrf.mxu0
        %v435 = vadd.f32 0.0, %v434
        %v436 = vpop.f32.mrf.mxu0
        %v437 = vadd.f32 0.0, %v436
        %438 = vmatmul.bf16.gmra.mxu0 %v375
        %v439 = vpop.f32.mrf.mxu0
        %v440 = vadd.f32 0.0, %v439
        %v441 = vpop.f32.mrf.mxu0
        %v442 = vadd.f32 0.0, %v441
        %443 = vdwg.mxu0
        %v448 = vunpack.c.l.b16 %v339
        %v449 = vunpack.c.l.b16 %v340
        %v450 = vunpack.c.l.b16 %v341
        %v451 = vunpack.c.l.b16 %v342
        %v452 = vpack.c.b16 %v449, %v448
        %v453 = vpack.c.b16 %v451, %v450
        %v455 = vsel %vm370, %v452, 0
        %v458 = vsel %vm370, %v453, 0
        %v461 = vsel %vm377, %v333, 0
        %v464 = vsel %vm377, %v334, 0
        %v467 = vsel %vm377, %v335, 0
        %469 = vmatpush.bf16.msra.mxu0 0
        %470 = vmatpush.bf16.msra.mxu0 0
        %471 = vmatpush.bf16.msra.mxu0 0
        %472 = vmatpush.bf16.msra.mxu0 0
        %473 = vmatpush.bf16.msra.mxu0 0
        %474 = vmatpush.bf16.msra.mxu0 0
        %475 = vmatpush.bf16.msra.mxu0 0
        %476 = vmatpush.bf16.msra.mxu0 %v461
        %477 = vmatmul.bf16.gmra.mxu0 %v455
        %v478 = vpop.f32.mrf.mxu0
        %v479 = vadd.f32 %v397, %v478
        %v480 = vpop.f32.mrf.mxu0
        %v481 = vadd.f32 %v399, %v480
        %482 = vmatmul.bf16.gmra.mxu0 %v458
        %v483 = vpop.f32.mrf.mxu0
        %v484 = vadd.f32 %v402, %v483
        %v485 = vpop.f32.mrf.mxu0
        %v486 = vadd.f32 %v404, %v485
        %487 = vdwg.mxu0
        %488 = vmatpush.bf16.msra.mxu0 0
        %489 = vmatpush.bf16.msra.mxu0 0
        %490 = vmatpush.bf16.msra.mxu0 0
        %491 = vmatpush.bf16.msra.mxu0 0
        %492 = vmatpush.bf16.msra.mxu0 0
        %493 = vmatpush.bf16.msra.mxu0 0
        %494 = vmatpush.bf16.msra.mxu0 0
        %495 = vmatpush.bf16.msra.mxu0 %v464
        %496 = vmatmul.bf16.gmra.mxu0 %v455
        %v497 = vpop.f32.mrf.mxu0
        %v498 = vadd.f32 %v416, %v497
        %v499 = vpop.f32.mrf.mxu0
        %v500 = vadd.f32 %v418, %v499
        %501 = vmatmul.bf16.gmra.mxu0 %v458
        %v502 = vpop.f32.mrf.mxu0
        %v503 = vadd.f32 %v421, %v502
        %v504 = vpop.f32.mrf.mxu0
        %v505 = vadd.f32 %v423, %v504
        %506 = vdwg.mxu0
        %507 = vmatpush.bf16.msra.mxu0 0
        %508 = vmatpush.bf16.msra.mxu0 0
        %509 = vmatpush.bf16.msra.mxu0 0
        %510 = vmatpush.bf16.msra.mxu0 0
        %511 = vmatpush.bf16.msra.mxu0 0
        %512 = vmatpush.bf16.msra.mxu0 0
        %513 = vmatpush.bf16.msra.mxu0 0
        %514 = vmatpush.bf16.msra.mxu0 %v467
        %515 = vmatmul.bf16.gmra.mxu0 %v455
        %v516 = vpop.f32.mrf.mxu0
        %v517 = vadd.f32 %v435, %v516
        %v518 = vpop.f32.mrf.mxu0
        %v519 = vadd.f32 %v437, %v518
        %520 = vmatmul.bf16.gmra.mxu0 %v458
        %v521 = vpop.f32.mrf.mxu0
        %v522 = vadd.f32 %v440, %v521
        %v523 = vpop.f32.mrf.mxu0
        %v524 = vadd.f32 %v442, %v523
        %525 = vdwg.mxu0
        %s526 = scalar_lea.vmem %s2, 32
        %v527 = vld [vmem:[%s526] sm:$0xf]
        %v528 = vld [vmem:[%s526 + $0x4] sm:$0xf]
        %v529 = vld [vmem:[%s526 + $0x8] sm:$0xf]
        %v530 = vld [vmem:[%s526 + $0xc] sm:$0xf]
        %v535 = vunpack.c.l.b16 %v527
        %v536 = vunpack.c.l.b16 %v528
        %v537 = vunpack.c.l.b16 %v529
        %v538 = vunpack.c.l.b16 %v530
        %v539 = vpack.c.b16 %v536, %v535
        %v540 = vpack.c.b16 %v538, %v537
        %541 = vrot.lane.b32.xlu0 %v333, 126
        %v542 = vpop.permute.xlu0 %541
        %543 = vrot.lane.b32.xlu0 %v334, 126
        %v544 = vpop.permute.xlu0 %543
        %545 = vrot.lane.b32.xlu0 %v335, 126
        %v546 = vpop.permute.xlu0 %545
        %547 = vrot.lane.b32.xlu0 %v338, 126
        %v548 = vpop.permute.xlu0 %547
        %vm549 = vcmask 1031168
        %v550 = vsel %vm549, %v542, %v544
        %v551 = vsel %vm549, %v544, %v546
        %v552 = vsel %vm549, %v546, %v548
        %v554 = vsel %vm370, %v539, 0
        %v557 = vsel %vm370, %v540, 0
        %v560 = vsel %vm377, %v550, 0
        %v563 = vsel %vm377, %v551, 0
        %v566 = vsel %vm377, %v552, 0
        %568 = vmatpush.bf16.msra.mxu0 0
        %569 = vmatpush.bf16.msra.mxu0 0
        %570 = vmatpush.bf16.msra.mxu0 0
        %571 = vmatpush.bf16.msra.mxu0 0
        %572 = vmatpush.bf16.msra.mxu0 0
        %573 = vmatpush.bf16.msra.mxu0 0
        %574 = vmatpush.bf16.msra.mxu0 0
        %575 = vmatpush.bf16.msra.mxu0 %v560
        %576 = vmatmul.bf16.gmra.mxu0 %v554
        %v577 = vpop.f32.mrf.mxu0
        %v578 = vadd.f32 0.0, %v577
        %v579 = vpop.f32.mrf.mxu0
        %v580 = vadd.f32 0.0, %v579
        %581 = vmatmul.bf16.gmra.mxu0 %v557
        %v582 = vpop.f32.mrf.mxu0
        %v583 = vadd.f32 0.0, %v582
        %v584 = vpop.f32.mrf.mxu0
        %v585 = vadd.f32 0.0, %v584
        %586 = vdwg.mxu0
        %587 = vmatpush.bf16.msra.mxu0 0
        %588 = vmatpush.bf16.msra.mxu0 0
        %589 = vmatpush.bf16.msra.mxu0 0
        %590 = vmatpush.bf16.msra.mxu0 0
        %591 = vmatpush.bf16.msra.mxu0 0
        %592 = vmatpush.bf16.msra.mxu0 0
        %593 = vmatpush.bf16.msra.mxu0 0
        %594 = vmatpush.bf16.msra.mxu0 %v563
        %595 = vmatmul.bf16.gmra.mxu0 %v554
        %v596 = vpop.f32.mrf.mxu0
        %v597 = vadd.f32 0.0, %v596
        %v598 = vpop.f32.mrf.mxu0
        %v599 = vadd.f32 0.0, %v598
        %600 = vmatmul.bf16.gmra.mxu0 %v557
        %v601 = vpop.f32.mrf.mxu0
        %v602 = vadd.f32 0.0, %v601
        %v603 = vpop.f32.mrf.mxu0
        %v604 = vadd.f32 0.0, %v603
        %605 = vdwg.mxu0
        %606 = vmatpush.bf16.msra.mxu0 0
        %607 = vmatpush.bf16.msra.mxu0 0
        %608 = vmatpush.bf16.msra.mxu0 0
        %609 = vmatpush.bf16.msra.mxu0 0
        %610 = vmatpush.bf16.msra.mxu0 0
        %611 = vmatpush.bf16.msra.mxu0 0
        %612 = vmatpush.bf16.msra.mxu0 0
        %613 = vmatpush.bf16.msra.mxu0 %v566
        %614 = vmatmul.bf16.gmra.mxu0 %v554
        %v615 = vpop.f32.mrf.mxu0
        %v616 = vadd.f32 0.0, %v615
        %v617 = vpop.f32.mrf.mxu0
        %v618 = vadd.f32 0.0, %v617
        %619 = vmatmul.bf16.gmra.mxu0 %v557
        %v620 = vpop.f32.mrf.mxu0
        %v621 = vadd.f32 0.0, %v620
        %v622 = vpop.f32.mrf.mxu0
        %v623 = vadd.f32 0.0, %v622
        %624 = vdwg.mxu0
        %v625 = vadd.f32 %v479, %v578
        %v626 = vadd.f32 %v498, %v597
        %v627 = vadd.f32 %v517, %v616
        %v628 = vadd.f32 %v481, %v580
        %v629 = vadd.f32 %v500, %v599
        %v630 = vadd.f32 %v519, %v618
        %v631 = vadd.f32 %v484, %v583
        %v632 = vadd.f32 %v503, %v602
        %v633 = vadd.f32 %v522, %v621
        %v634 = vadd.f32 %v486, %v585
        %v635 = vadd.f32 %v505, %v604
        %v636 = vadd.f32 %v524, %v623
        %s637 = scalar_lea.vmem %s2, 48
        %v638 = vld [vmem:[%s637] sm:$0xf]
        %v639 = vld [vmem:[%s637 + $0x4] sm:$0xf]
        %v640 = vld [vmem:[%s637 + $0x8] sm:$0xf]
        %v641 = vld [vmem:[%s637 + $0xc] sm:$0xf]
        %v646 = vunpack.c.l.b16 %v638
        %v647 = vunpack.c.l.b16 %v639
        %v648 = vunpack.c.l.b16 %v640
        %v649 = vunpack.c.l.b16 %v641
        %v650 = vpack.c.b16 %v647, %v646
        %v651 = vpack.c.b16 %v649, %v648
        %652 = vrot.lane.b32.xlu0 %v333, 110
        %v653 = vpop.permute.xlu0 %652
        %654 = vrot.lane.b32.xlu0 %v334, 110
        %v655 = vpop.permute.xlu0 %654
        %656 = vrot.lane.b32.xlu0 %v335, 110
        %v657 = vpop.permute.xlu0 %656
        %658 = vrot.lane.b32.xlu0 %v338, 110
        %v659 = vpop.permute.xlu0 %658
        %vm660 = vcmask 900096
        %v661 = vsel %vm660, %v653, %v655
        %v662 = vsel %vm660, %v655, %v657
        %v663 = vsel %vm660, %v657, %v659
        %v665 = vsel %vm370, %v650, 0
        %v668 = vsel %vm370, %v651, 0
        %v671 = vsel %vm377, %v661, 0
        %v674 = vsel %vm377, %v662, 0
        %v677 = vsel %vm377, %v663, 0
        %679 = vmatpush.bf16.msra.mxu0 0
        %680 = vmatpush.bf16.msra.mxu0 0
        %681 = vmatpush.bf16.msra.mxu0 0
        %682 = vmatpush.bf16.msra.mxu0 0
        %683 = vmatpush.bf16.msra.mxu0 0
        %684 = vmatpush.bf16.msra.mxu0 0
        %685 = vmatpush.bf16.msra.mxu0 0
        %686 = vmatpush.bf16.msra.mxu0 %v671
        %687 = vmatmul.bf16.gmra.mxu0 %v665
        %v688 = vpop.f32.mrf.mxu0
        %v689 = vadd.f32 0.0, %v688
        %v690 = vpop.f32.mrf.mxu0
        %v691 = vadd.f32 0.0, %v690
        %692 = vmatmul.bf16.gmra.mxu0 %v668
        %v693 = vpop.f32.mrf.mxu0
        %v694 = vadd.f32 0.0, %v693
        %v695 = vpop.f32.mrf.mxu0
        %v696 = vadd.f32 0.0, %v695
        %697 = vdwg.mxu0
        %698 = vmatpush.bf16.msra.mxu0 0
        %699 = vmatpush.bf16.msra.mxu0 0
        %700 = vmatpush.bf16.msra.mxu0 0
        %701 = vmatpush.bf16.msra.mxu0 0
        %702 = vmatpush.bf16.msra.mxu0 0
        %703 = vmatpush.bf16.msra.mxu0 0
        %704 = vmatpush.bf16.msra.mxu0 0
        %705 = vmatpush.bf16.msra.mxu0 %v674
        %706 = vmatmul.bf16.gmra.mxu0 %v665
        %v707 = vpop.f32.mrf.mxu0
        %v708 = vadd.f32 0.0, %v707
        %v709 = vpop.f32.mrf.mxu0
        %v710 = vadd.f32 0.0, %v709
        %711 = vmatmul.bf16.gmra.mxu0 %v668
        %v712 = vpop.f32.mrf.mxu0
        %v713 = vadd.f32 0.0, %v712
        %v714 = vpop.f32.mrf.mxu0
        %v715 = vadd.f32 0.0, %v714
        %716 = vdwg.mxu0
        %717 = vmatpush.bf16.msra.mxu0 0
        %718 = vmatpush.bf16.msra.mxu0 0
        %719 = vmatpush.bf16.msra.mxu0 0
        %720 = vmatpush.bf16.msra.mxu0 0
        %721 = vmatpush.bf16.msra.mxu0 0
        %722 = vmatpush.bf16.msra.mxu0 0
        %723 = vmatpush.bf16.msra.mxu0 0
        %724 = vmatpush.bf16.msra.mxu0 %v677
        %725 = vmatmul.bf16.gmra.mxu0 %v665
        %v726 = vpop.f32.mrf.mxu0
        %v727 = vadd.f32 0.0, %v726
        %v728 = vpop.f32.mrf.mxu0
        %v729 = vadd.f32 0.0, %v728
        %730 = vmatmul.bf16.gmra.mxu0 %v668
        %v731 = vpop.f32.mrf.mxu0
        %v732 = vadd.f32 0.0, %v731
        %v733 = vpop.f32.mrf.mxu0
        %v734 = vadd.f32 0.0, %v733
        %735 = vdwg.mxu0
        %v736 = vadd.f32 %v625, %v689
        %v737 = vadd.f32 %v626, %v708
        %v738 = vadd.f32 %v627, %v727
        %v739 = vadd.f32 %v628, %v691
        %v740 = vadd.f32 %v629, %v710
        %v741 = vadd.f32 %v630, %v729
        %v742 = vadd.f32 %v631, %v694
        %v743 = vadd.f32 %v632, %v713
        %v744 = vadd.f32 %v633, %v732
        %v745 = vadd.f32 %v634, %v696
        %v746 = vadd.f32 %v635, %v715
        %v747 = vadd.f32 %v636, %v734
        %s748 = scalar_lea.vmem %s2, 64
        %v749 = vld [vmem:[%s748] sm:$0xf]
        %v750 = vld [vmem:[%s748 + $0x4] sm:$0xf]
        %v751 = vld [vmem:[%s748 + $0x8] sm:$0xf]
        %v752 = vld [vmem:[%s748 + $0xc] sm:$0xf]
        %v757 = vunpack.c.l.b16 %v749
        %v758 = vunpack.c.l.b16 %v750
        %v759 = vunpack.c.l.b16 %v751
        %v760 = vunpack.c.l.b16 %v752
        %v761 = vpack.c.b16 %v758, %v757
        %v762 = vpack.c.b16 %v760, %v759
        %763 = vrot.lane.b32.xlu0 %v333, 109
        %v764 = vpop.permute.xlu0 %763
        %765 = vrot.lane.b32.xlu0 %v334, 109
        %v766 = vpop.permute.xlu0 %765
        %767 = vrot.lane.b32.xlu0 %v335, 109
        %v768 = vpop.permute.xlu0 %767
        %769 = vrot.lane.b32.xlu0 %v338, 109
        %v770 = vpop.permute.xlu0 %769
        %vm771 = vcmask 891904
        %v772 = vsel %vm771, %v764, %v766
        %v773 = vsel %vm771, %v766, %v768
        %v774 = vsel %vm771, %v768, %v770
        %v776 = vsel %vm370, %v761, 0
        %v779 = vsel %vm370, %v762, 0
        %v782 = vsel %vm377, %v772, 0
        %v785 = vsel %vm377, %v773, 0
        %v788 = vsel %vm377, %v774, 0
        %790 = vmatpush.bf16.msra.mxu0 0
        %791 = vmatpush.bf16.msra.mxu0 0
        %792 = vmatpush.bf16.msra.mxu0 0
        %793 = vmatpush.bf16.msra.mxu0 0
        %794 = vmatpush.bf16.msra.mxu0 0
        %795 = vmatpush.bf16.msra.mxu0 0
        %796 = vmatpush.bf16.msra.mxu0 0
        %797 = vmatpush.bf16.msra.mxu0 %v782
        %798 = vmatmul.bf16.gmra.mxu0 %v776
        %v799 = vpop.f32.mrf.mxu0
        %v800 = vadd.f32 0.0, %v799
        %v801 = vpop.f32.mrf.mxu0
        %v802 = vadd.f32 0.0, %v801
        %803 = vmatmul.bf16.gmra.mxu0 %v779
        %v804 = vpop.f32.mrf.mxu0
        %v805 = vadd.f32 0.0, %v804
        %v806 = vpop.f32.mrf.mxu0
        %v807 = vadd.f32 0.0, %v806
        %808 = vdwg.mxu0
        %809 = vmatpush.bf16.msra.mxu0 0
        %810 = vmatpush.bf16.msra.mxu0 0
        %811 = vmatpush.bf16.msra.mxu0 0
        %812 = vmatpush.bf16.msra.mxu0 0
        %813 = vmatpush.bf16.msra.mxu0 0
        %814 = vmatpush.bf16.msra.mxu0 0
        %815 = vmatpush.bf16.msra.mxu0 0
        %816 = vmatpush.bf16.msra.mxu0 %v785
        %817 = vmatmul.bf16.gmra.mxu0 %v776
        %v818 = vpop.f32.mrf.mxu0
        %v819 = vadd.f32 0.0, %v818
        %v820 = vpop.f32.mrf.mxu0
        %v821 = vadd.f32 0.0, %v820
        %822 = vmatmul.bf16.gmra.mxu0 %v779
        %v823 = vpop.f32.mrf.mxu0
        %v824 = vadd.f32 0.0, %v823
        %v825 = vpop.f32.mrf.mxu0
        %v826 = vadd.f32 0.0, %v825
        %827 = vdwg.mxu0
        %828 = vmatpush.bf16.msra.mxu0 0
        %829 = vmatpush.bf16.msra.mxu0 0
        %830 = vmatpush.bf16.msra.mxu0 0
        %831 = vmatpush.bf16.msra.mxu0 0
        %832 = vmatpush.bf16.msra.mxu0 0
        %833 = vmatpush.bf16.msra.mxu0 0
        %834 = vmatpush.bf16.msra.mxu0 0
        %835 = vmatpush.bf16.msra.mxu0 %v788
        %836 = vmatmul.bf16.gmra.mxu0 %v776
        %v837 = vpop.f32.mrf.mxu0
        %v838 = vadd.f32 0.0, %v837
        %v839 = vpop.f32.mrf.mxu0
        %v840 = vadd.f32 0.0, %v839
        %841 = vmatmul.bf16.gmra.mxu0 %v779
        %v842 = vpop.f32.mrf.mxu0
        %v843 = vadd.f32 0.0, %v842
        %v844 = vpop.f32.mrf.mxu0
        %v845 = vadd.f32 0.0, %v844
        %846 = vdwg.mxu0
        %v847 = vadd.f32 %v736, %v800
        %v848 = vadd.f32 %v737, %v819
        %v849 = vadd.f32 %v738, %v838
        %v850 = vadd.f32 %v739, %v802
        %v851 = vadd.f32 %v740, %v821
        %v852 = vadd.f32 %v741, %v840
        %v853 = vadd.f32 %v742, %v805
        %v854 = vadd.f32 %v743, %v824
        %v855 = vadd.f32 %v744, %v843
        %v856 = vadd.f32 %v745, %v807
        %v857 = vadd.f32 %v746, %v826
        %v858 = vadd.f32 %v747, %v845
        %s859 = scalar_lea.vmem %s2, 80
        %v860 = vld [vmem:[%s859] sm:$0xf]
        %v861 = vld [vmem:[%s859 + $0x4] sm:$0xf]
        %v862 = vld [vmem:[%s859 + $0x8] sm:$0xf]
        %v863 = vld [vmem:[%s859 + $0xc] sm:$0xf]
        %v868 = vunpack.c.l.b16 %v860
        %v869 = vunpack.c.l.b16 %v861
        %v870 = vunpack.c.l.b16 %v862
        %v871 = vunpack.c.l.b16 %v863
        %v872 = vpack.c.b16 %v869, %v868
        %v873 = vpack.c.b16 %v871, %v870
        %874 = vrot.lane.b32.xlu0 %v333, 108
        %v875 = vpop.permute.xlu0 %874
        %876 = vrot.lane.b32.xlu0 %v334, 108
        %v877 = vpop.permute.xlu0 %876
        %878 = vrot.lane.b32.xlu0 %v335, 108
        %v879 = vpop.permute.xlu0 %878
        %880 = vrot.lane.b32.xlu0 %v338, 108
        %v881 = vpop.permute.xlu0 %880
        %vm882 = vcmask 883712
        %v883 = vsel %vm882, %v875, %v877
        %v884 = vsel %vm882, %v877, %v879
        %v885 = vsel %vm882, %v879, %v881
        %v887 = vsel %vm370, %v872, 0
        %v890 = vsel %vm370, %v873, 0
        %v893 = vsel %vm377, %v883, 0
        %v896 = vsel %vm377, %v884, 0
        %v899 = vsel %vm377, %v885, 0
        %901 = vmatpush.bf16.msra.mxu0 0
        %902 = vmatpush.bf16.msra.mxu0 0
        %903 = vmatpush.bf16.msra.mxu0 0
        %904 = vmatpush.bf16.msra.mxu0 0
        %905 = vmatpush.bf16.msra.mxu0 0
        %906 = vmatpush.bf16.msra.mxu0 0
        %907 = vmatpush.bf16.msra.mxu0 0
        %908 = vmatpush.bf16.msra.mxu0 %v893
        %909 = vmatmul.bf16.gmra.mxu0 %v887
        %v910 = vpop.f32.mrf.mxu0
        %v911 = vadd.f32 0.0, %v910
        %v912 = vpop.f32.mrf.mxu0
        %v913 = vadd.f32 0.0, %v912
        %914 = vmatmul.bf16.gmra.mxu0 %v890
        %v915 = vpop.f32.mrf.mxu0
        %v916 = vadd.f32 0.0, %v915
        %v917 = vpop.f32.mrf.mxu0
        %v918 = vadd.f32 0.0, %v917
        %919 = vdwg.mxu0
        %920 = vmatpush.bf16.msra.mxu0 0
        %921 = vmatpush.bf16.msra.mxu0 0
        %922 = vmatpush.bf16.msra.mxu0 0
        %923 = vmatpush.bf16.msra.mxu0 0
        %924 = vmatpush.bf16.msra.mxu0 0
        %925 = vmatpush.bf16.msra.mxu0 0
        %926 = vmatpush.bf16.msra.mxu0 0
        %927 = vmatpush.bf16.msra.mxu0 %v896
        %928 = vmatmul.bf16.gmra.mxu0 %v887
        %v929 = vpop.f32.mrf.mxu0
        %v930 = vadd.f32 0.0, %v929
        %v931 = vpop.f32.mrf.mxu0
        %v932 = vadd.f32 0.0, %v931
        %933 = vmatmul.bf16.gmra.mxu0 %v890
        %v934 = vpop.f32.mrf.mxu0
        %v935 = vadd.f32 0.0, %v934
        %v936 = vpop.f32.mrf.mxu0
        %v937 = vadd.f32 0.0, %v936
        %938 = vdwg.mxu0
        %939 = vmatpush.bf16.msra.mxu0 0
        %940 = vmatpush.bf16.msra.mxu0 0
        %941 = vmatpush.bf16.msra.mxu0 0
        %942 = vmatpush.bf16.msra.mxu0 0
        %943 = vmatpush.bf16.msra.mxu0 0
        %944 = vmatpush.bf16.msra.mxu0 0
        %945 = vmatpush.bf16.msra.mxu0 0
        %946 = vmatpush.bf16.msra.mxu0 %v899
        %947 = vmatmul.bf16.gmra.mxu0 %v887
        %v948 = vpop.f32.mrf.mxu0
        %v949 = vadd.f32 0.0, %v948
        %v950 = vpop.f32.mrf.mxu0
        %v951 = vadd.f32 0.0, %v950
        %952 = vmatmul.bf16.gmra.mxu0 %v890
        %v953 = vpop.f32.mrf.mxu0
        %v954 = vadd.f32 0.0, %v953
        %v955 = vpop.f32.mrf.mxu0
        %v956 = vadd.f32 0.0, %v955
        %957 = vdwg.mxu0
        %v958 = vadd.f32 %v847, %v911
        %v959 = vadd.f32 %v848, %v930
        %v960 = vadd.f32 %v849, %v949
        %v961 = vadd.f32 %v850, %v913
        %v962 = vadd.f32 %v851, %v932
        %v963 = vadd.f32 %v852, %v951
        %v964 = vadd.f32 %v853, %v916
        %v965 = vadd.f32 %v854, %v935
        %v966 = vadd.f32 %v855, %v954
        %v967 = vadd.f32 %v856, %v918
        %v968 = vadd.f32 %v857, %v937
        %v969 = vadd.f32 %v858, %v956
        %s970 = scalar_lea.vmem %s2, 96
        %v971 = vld [vmem:[%s970] sm:$0xf]
        %v972 = vld [vmem:[%s970 + $0x4] sm:$0xf]
        %v973 = vld [vmem:[%s970 + $0x8] sm:$0xf]
        %v974 = vld [vmem:[%s970 + $0xc] sm:$0xf]
        %v979 = vunpack.c.l.b16 %v971
        %v980 = vunpack.c.l.b16 %v972
        %v981 = vunpack.c.l.b16 %v973
        %v982 = vunpack.c.l.b16 %v974
        %v983 = vpack.c.b16 %v980, %v979
        %v984 = vpack.c.b16 %v982, %v981
        %985 = vrot.lane.b32.xlu0 %v333, 92
        %v986 = vpop.permute.xlu0 %985
        %987 = vrot.lane.b32.xlu0 %v334, 92
        %v988 = vpop.permute.xlu0 %987
        %989 = vrot.lane.b32.xlu0 %v335, 92
        %v990 = vpop.permute.xlu0 %989
        %991 = vrot.lane.b32.xlu0 %v338, 92
        %v992 = vpop.permute.xlu0 %991
        %vm993 = vcmask 752640
        %v994 = vsel %vm993, %v986, %v988
        %v995 = vsel %vm993, %v988, %v990
        %v996 = vsel %vm993, %v990, %v992
        %v998 = vsel %vm370, %v983, 0
        %v1001 = vsel %vm370, %v984, 0
        %v1004 = vsel %vm377, %v994, 0
        %v1007 = vsel %vm377, %v995, 0
        %v1010 = vsel %vm377, %v996, 0
        %1012 = vmatpush.bf16.msra.mxu0 0
        %1013 = vmatpush.bf16.msra.mxu0 0
        %1014 = vmatpush.bf16.msra.mxu0 0
        %1015 = vmatpush.bf16.msra.mxu0 0
        %1016 = vmatpush.bf16.msra.mxu0 0
        %1017 = vmatpush.bf16.msra.mxu0 0
        %1018 = vmatpush.bf16.msra.mxu0 0
        %1019 = vmatpush.bf16.msra.mxu0 %v1004
        %1020 = vmatmul.bf16.gmra.mxu0 %v998
        %v1021 = vpop.f32.mrf.mxu0
        %v1022 = vadd.f32 0.0, %v1021
        %v1023 = vpop.f32.mrf.mxu0
        %v1024 = vadd.f32 0.0, %v1023
        %1025 = vmatmul.bf16.gmra.mxu0 %v1001
        %v1026 = vpop.f32.mrf.mxu0
        %v1027 = vadd.f32 0.0, %v1026
        %v1028 = vpop.f32.mrf.mxu0
        %v1029 = vadd.f32 0.0, %v1028
        %1030 = vdwg.mxu0
        %1031 = vmatpush.bf16.msra.mxu0 0
        %1032 = vmatpush.bf16.msra.mxu0 0
        %1033 = vmatpush.bf16.msra.mxu0 0
        %1034 = vmatpush.bf16.msra.mxu0 0
        %1035 = vmatpush.bf16.msra.mxu0 0
        %1036 = vmatpush.bf16.msra.mxu0 0
        %1037 = vmatpush.bf16.msra.mxu0 0
        %1038 = vmatpush.bf16.msra.mxu0 %v1007
        %1039 = vmatmul.bf16.gmra.mxu0 %v998
        %v1040 = vpop.f32.mrf.mxu0
        %v1041 = vadd.f32 0.0, %v1040
        %v1042 = vpop.f32.mrf.mxu0
        %v1043 = vadd.f32 0.0, %v1042
        %1044 = vmatmul.bf16.gmra.mxu0 %v1001
        %v1045 = vpop.f32.mrf.mxu0
        %v1046 = vadd.f32 0.0, %v1045
        %v1047 = vpop.f32.mrf.mxu0
        %v1048 = vadd.f32 0.0, %v1047
        %1049 = vdwg.mxu0
        %1050 = vmatpush.bf16.msra.mxu0 0
        %1051 = vmatpush.bf16.msra.mxu0 0
        %1052 = vmatpush.bf16.msra.mxu0 0
        %1053 = vmatpush.bf16.msra.mxu0 0
        %1054 = vmatpush.bf16.msra.mxu0 0
        %1055 = vmatpush.bf16.msra.mxu0 0
        %1056 = vmatpush.bf16.msra.mxu0 0
        %1057 = vmatpush.bf16.msra.mxu0 %v1010
        %1058 = vmatmul.bf16.gmra.mxu0 %v998
        %v1059 = vpop.f32.mrf.mxu0
        %v1060 = vadd.f32 0.0, %v1059
        %v1061 = vpop.f32.mrf.mxu0
        %v1062 = vadd.f32 0.0, %v1061
        %1063 = vmatmul.bf16.gmra.mxu0 %v1001
        %v1064 = vpop.f32.mrf.mxu0
        %v1065 = vadd.f32 0.0, %v1064
        %v1066 = vpop.f32.mrf.mxu0
        %v1067 = vadd.f32 0.0, %v1066
        %1068 = vdwg.mxu0
        %v1069 = vadd.f32 %v958, %v1022
        %v1070 = vadd.f32 %v959, %v1041
        %v1071 = vadd.f32 %v960, %v1060
        %v1072 = vadd.f32 %v961, %v1024
        %v1073 = vadd.f32 %v962, %v1043
        %v1074 = vadd.f32 %v963, %v1062
        %v1075 = vadd.f32 %v964, %v1027
        %v1076 = vadd.f32 %v965, %v1046
        %v1077 = vadd.f32 %v966, %v1065
        %v1078 = vadd.f32 %v967, %v1029
        %v1079 = vadd.f32 %v968, %v1048
        %v1080 = vadd.f32 %v969, %v1067
        %s1081 = scalar_lea.vmem %s2, 112
        %v1082 = vld [vmem:[%s1081] sm:$0xf]
        %v1083 = vld [vmem:[%s1081 + $0x4] sm:$0xf]
        %v1084 = vld [vmem:[%s1081 + $0x8] sm:$0xf]
        %v1085 = vld [vmem:[%s1081 + $0xc] sm:$0xf]
        %v1090 = vunpack.c.l.b16 %v1082
        %v1091 = vunpack.c.l.b16 %v1083
        %v1092 = vunpack.c.l.b16 %v1084
        %v1093 = vunpack.c.l.b16 %v1085
        %v1094 = vpack.c.b16 %v1091, %v1090
        %v1095 = vpack.c.b16 %v1093, %v1092
        %1096 = vrot.lane.b32.xlu0 %v333, 91
        %v1097 = vpop.permute.xlu0 %1096
        %1098 = vrot.lane.b32.xlu0 %v334, 91
        %v1099 = vpop.permute.xlu0 %1098
        %1100 = vrot.lane.b32.xlu0 %v335, 91
        %v1101 = vpop.permute.xlu0 %1100
        %1102 = vrot.lane.b32.xlu0 %v338, 91
        %v1103 = vpop.permute.xlu0 %1102
        %vm1104 = vcmask 744448
        %v1105 = vsel %vm1104, %v1097, %v1099
        %v1106 = vsel %vm1104, %v1099, %v1101
        %v1107 = vsel %vm1104, %v1101, %v1103
        %v1109 = vsel %vm370, %v1094, 0
        %v1112 = vsel %vm370, %v1095, 0
        %v1115 = vsel %vm377, %v1105, 0
        %v1118 = vsel %vm377, %v1106, 0
        %v1121 = vsel %vm377, %v1107, 0
        %1123 = vmatpush.bf16.msra.mxu0 0
        %1124 = vmatpush.bf16.msra.mxu0 0
        %1125 = vmatpush.bf16.msra.mxu0 0
        %1126 = vmatpush.bf16.msra.mxu0 0
        %1127 = vmatpush.bf16.msra.mxu0 0
        %1128 = vmatpush.bf16.msra.mxu0 0
        %1129 = vmatpush.bf16.msra.mxu0 0
        %1130 = vmatpush.bf16.msra.mxu0 %v1115
        %1131 = vmatmul.bf16.gmra.mxu0 %v1109
        %v1132 = vpop.f32.mrf.mxu0
        %v1133 = vadd.f32 0.0, %v1132
        %v1134 = vpop.f32.mrf.mxu0
        %v1135 = vadd.f32 0.0, %v1134
        %1136 = vmatmul.bf16.gmra.mxu0 %v1112
        %v1137 = vpop.f32.mrf.mxu0
        %v1138 = vadd.f32 0.0, %v1137
        %v1139 = vpop.f32.mrf.mxu0
        %v1140 = vadd.f32 0.0, %v1139
        %1141 = vdwg.mxu0
        %1142 = vmatpush.bf16.msra.mxu0 0
        %1143 = vmatpush.bf16.msra.mxu0 0
        %1144 = vmatpush.bf16.msra.mxu0 0
        %1145 = vmatpush.bf16.msra.mxu0 0
        %1146 = vmatpush.bf16.msra.mxu0 0
        %1147 = vmatpush.bf16.msra.mxu0 0
        %1148 = vmatpush.bf16.msra.mxu0 0
        %1149 = vmatpush.bf16.msra.mxu0 %v1118
        %1150 = vmatmul.bf16.gmra.mxu0 %v1109
        %v1151 = vpop.f32.mrf.mxu0
        %v1152 = vadd.f32 0.0, %v1151
        %v1153 = vpop.f32.mrf.mxu0
        %v1154 = vadd.f32 0.0, %v1153
        %1155 = vmatmul.bf16.gmra.mxu0 %v1112
        %v1156 = vpop.f32.mrf.mxu0
        %v1157 = vadd.f32 0.0, %v1156
        %v1158 = vpop.f32.mrf.mxu0
        %v1159 = vadd.f32 0.0, %v1158
        %1160 = vdwg.mxu0
        %1161 = vmatpush.bf16.msra.mxu0 0
        %1162 = vmatpush.bf16.msra.mxu0 0
        %1163 = vmatpush.bf16.msra.mxu0 0
        %1164 = vmatpush.bf16.msra.mxu0 0
        %1165 = vmatpush.bf16.msra.mxu0 0
        %1166 = vmatpush.bf16.msra.mxu0 0
        %1167 = vmatpush.bf16.msra.mxu0 0
        %1168 = vmatpush.bf16.msra.mxu0 %v1121
        %1169 = vmatmul.bf16.gmra.mxu0 %v1109
        %v1170 = vpop.f32.mrf.mxu0
        %v1171 = vadd.f32 0.0, %v1170
        %v1172 = vpop.f32.mrf.mxu0
        %v1173 = vadd.f32 0.0, %v1172
        %1174 = vmatmul.bf16.gmra.mxu0 %v1112
        %v1175 = vpop.f32.mrf.mxu0
        %v1176 = vadd.f32 0.0, %v1175
        %v1177 = vpop.f32.mrf.mxu0
        %v1178 = vadd.f32 0.0, %v1177
        %1179 = vdwg.mxu0
        %v1180 = vadd.f32 %v1069, %v1133
        %v1181 = vadd.f32 %v1070, %v1152
        %v1182 = vadd.f32 %v1071, %v1171
        %v1183 = vadd.f32 %v1072, %v1135
        %v1184 = vadd.f32 %v1073, %v1154
        %v1185 = vadd.f32 %v1074, %v1173
        %v1186 = vadd.f32 %v1075, %v1138
        %v1187 = vadd.f32 %v1076, %v1157
        %v1188 = vadd.f32 %v1077, %v1176
        %v1189 = vadd.f32 %v1078, %v1140
        %v1190 = vadd.f32 %v1079, %v1159
        %v1191 = vadd.f32 %v1080, %v1178
        %s1192 = scalar_lea.vmem %s2, 128
        %v1193 = vld [vmem:[%s1192] sm:$0xf]
        %v1194 = vld [vmem:[%s1192 + $0x4] sm:$0xf]
        %v1195 = vld [vmem:[%s1192 + $0x8] sm:$0xf]
        %v1196 = vld [vmem:[%s1192 + $0xc] sm:$0xf]
        %v1201 = vunpack.c.l.b16 %v1193
        %v1202 = vunpack.c.l.b16 %v1194
        %v1203 = vunpack.c.l.b16 %v1195
        %v1204 = vunpack.c.l.b16 %v1196
        %v1205 = vpack.c.b16 %v1202, %v1201
        %v1206 = vpack.c.b16 %v1204, %v1203
        %1207 = vrot.lane.b32.xlu0 %v333, 90
        %v1208 = vpop.permute.xlu0 %1207
        %1209 = vrot.lane.b32.xlu0 %v334, 90
        %v1210 = vpop.permute.xlu0 %1209
        %1211 = vrot.lane.b32.xlu0 %v335, 90
        %v1212 = vpop.permute.xlu0 %1211
        %1213 = vrot.lane.b32.xlu0 %v338, 90
        %v1214 = vpop.permute.xlu0 %1213
        %vm1215 = vcmask 736256
        %v1216 = vsel %vm1215, %v1208, %v1210
        %v1217 = vsel %vm1215, %v1210, %v1212
        %v1218 = vsel %vm1215, %v1212, %v1214
        %v1220 = vsel %vm370, %v1205, 0
        %v1223 = vsel %vm370, %v1206, 0
        %v1226 = vsel %vm377, %v1216, 0
        %v1229 = vsel %vm377, %v1217, 0
        %v1232 = vsel %vm377, %v1218, 0
        %1234 = vmatpush.bf16.msra.mxu0 0
        %1235 = vmatpush.bf16.msra.mxu0 0
        %1236 = vmatpush.bf16.msra.mxu0 0
        %1237 = vmatpush.bf16.msra.mxu0 0
        %1238 = vmatpush.bf16.msra.mxu0 0
        %1239 = vmatpush.bf16.msra.mxu0 0
        %1240 = vmatpush.bf16.msra.mxu0 0
        %1241 = vmatpush.bf16.msra.mxu0 %v1226
        %1242 = vmatmul.bf16.gmra.mxu0 %v1220
        %v1243 = vpop.f32.mrf.mxu0
        %v1244 = vadd.f32 0.0, %v1243
        %v1245 = vpop.f32.mrf.mxu0
        %v1246 = vadd.f32 0.0, %v1245
        %1247 = vmatmul.bf16.gmra.mxu0 %v1223
        %v1248 = vpop.f32.mrf.mxu0
        %v1249 = vadd.f32 0.0, %v1248
        %v1250 = vpop.f32.mrf.mxu0
        %v1251 = vadd.f32 0.0, %v1250
        %1252 = vdwg.mxu0
        %1253 = vmatpush.bf16.msra.mxu0 0
        %1254 = vmatpush.bf16.msra.mxu0 0
        %1255 = vmatpush.bf16.msra.mxu0 0
        %1256 = vmatpush.bf16.msra.mxu0 0
        %1257 = vmatpush.bf16.msra.mxu0 0
        %1258 = vmatpush.bf16.msra.mxu0 0
        %1259 = vmatpush.bf16.msra.mxu0 0
        %1260 = vmatpush.bf16.msra.mxu0 %v1229
        %1261 = vmatmul.bf16.gmra.mxu0 %v1220
        %v1262 = vpop.f32.mrf.mxu0
        %v1263 = vadd.f32 0.0, %v1262
        %v1264 = vpop.f32.mrf.mxu0
        %v1265 = vadd.f32 0.0, %v1264
        %1266 = vmatmul.bf16.gmra.mxu0 %v1223
        %v1267 = vpop.f32.mrf.mxu0
        %v1268 = vadd.f32 0.0, %v1267
        %v1269 = vpop.f32.mrf.mxu0
        %v1270 = vadd.f32 0.0, %v1269
        %1271 = vdwg.mxu0
        %1272 = vmatpush.bf16.msra.mxu0 0
        %1273 = vmatpush.bf16.msra.mxu0 0
        %1274 = vmatpush.bf16.msra.mxu0 0
        %1275 = vmatpush.bf16.msra.mxu0 0
        %1276 = vmatpush.bf16.msra.mxu0 0
        %1277 = vmatpush.bf16.msra.mxu0 0
        %1278 = vmatpush.bf16.msra.mxu0 0
        %1279 = vmatpush.bf16.msra.mxu0 %v1232
        %1280 = vmatmul.bf16.gmra.mxu0 %v1220
        %v1281 = vpop.f32.mrf.mxu0
        %v1282 = vadd.f32 0.0, %v1281
        %v1283 = vpop.f32.mrf.mxu0
        %v1284 = vadd.f32 0.0, %v1283
        %1285 = vmatmul.bf16.gmra.mxu0 %v1223
        %v1286 = vpop.f32.mrf.mxu0
        %v1287 = vadd.f32 0.0, %v1286
        %v1288 = vpop.f32.mrf.mxu0
        %v1289 = vadd.f32 0.0, %v1288
        %1290 = vdwg.mxu0
        %v1291 = vadd.f32 %v1180, %v1244
        %v1292 = vadd.f32 %v1181, %v1263
        %v1293 = vadd.f32 %v1182, %v1282
        %v1294 = vadd.f32 %v1183, %v1246
        %v1295 = vadd.f32 %v1184, %v1265
        %v1296 = vadd.f32 %v1185, %v1284
        %v1297 = vadd.f32 %v1186, %v1249
        %v1298 = vadd.f32 %v1187, %v1268
        %v1299 = vadd.f32 %v1188, %v1287
        %v1300 = vadd.f32 %v1189, %v1251
        %v1301 = vadd.f32 %v1190, %v1270
        %v1302 = vadd.f32 %v1191, %v1289
        %v1303 = vld [vmem:[%s3] sm:$0xff]
        %v1304 = vld [vmem:[%s3 + $0x8] sm:$0xff]
        %v1305 = vld [vmem:[%s3 + $0x10] sm:$0xff]
        %v1306 = vld [vmem:[%s3 + $0x18] sm:$0xff]
        %1308 = vset.pattern.permute.xlu0 0
        %1309 = vperm.xlu0 %1308, %v1303
        %v1310 = vpop.permute.xlu0 %1309
        %1313 = vset.pattern.permute.xlu0 0
        %1314 = vperm.xlu0 %1313, %v1304
        %v1315 = vpop.permute.xlu0 %1314
        %1318 = vset.pattern.permute.xlu0 0
        %1319 = vperm.xlu0 %1318, %v1305
        %v1320 = vpop.permute.xlu0 %1319
        %1323 = vset.pattern.permute.xlu0 0
        %1324 = vperm.xlu0 %1323, %v1306
        %v1325 = vpop.permute.xlu0 %1324
        %v1327 = vadd.f32 %v1291, %v1310
        %v1328 = vadd.f32 %v1292, %v1310
        %v1329 = vadd.f32 %v1293, %v1310
        %v1330 = vadd.f32 %v1294, %v1315
        %v1331 = vadd.f32 %v1295, %v1315
        %v1332 = vadd.f32 %v1296, %v1315
        %v1333 = vadd.f32 %v1297, %v1320
        %v1334 = vadd.f32 %v1298, %v1320
        %v1335 = vadd.f32 %v1299, %v1320
        %v1336 = vadd.f32 %v1300, %v1325
        %v1337 = vadd.f32 %v1301, %v1325
        %v1338 = vadd.f32 %v1302, %v1325
        %v1339 = vxor.u32 %v1327, 2147483648
        %v1340 = vxor.u32 %v1328, 2147483648
        %v1341 = vxor.u32 %v1329, 2147483648
        %v1342 = vxor.u32 %v1330, 2147483648
        %v1343 = vxor.u32 %v1331, 2147483648
        %v1344 = vxor.u32 %v1332, 2147483648
        %v1345 = vxor.u32 %v1333, 2147483648
        %v1346 = vxor.u32 %v1334, 2147483648
        %v1347 = vxor.u32 %v1335, 2147483648
        %v1348 = vxor.u32 %v1336, 2147483648
        %v1349 = vxor.u32 %v1337, 2147483648
        %v1350 = vxor.u32 %v1338, 2147483648
        %v1351 = vmul.f32 %v1339, 1.442695
        %v1352 = vpow.pop %v1351
        %v1353 = vmul.f32 %v1340, 1.442695
        %v1354 = vpow.pop %v1353
        %v1355 = vmul.f32 %v1341, 1.442695
        %v1356 = vpow.pop %v1355
        %v1357 = vmul.f32 %v1342, 1.442695
        %v1358 = vpow.pop %v1357
        %v1359 = vmul.f32 %v1343, 1.442695
        %v1360 = vpow.pop %v1359
        %v1361 = vmul.f32 %v1344, 1.442695
        %v1362 = vpow.pop %v1361
        %v1363 = vmul.f32 %v1345, 1.442695
        %v1364 = vpow.pop %v1363
        %v1365 = vmul.f32 %v1346, 1.442695
        %v1366 = vpow.pop %v1365
        %v1367 = vmul.f32 %v1347, 1.442695
        %v1368 = vpow.pop %v1367
        %v1369 = vmul.f32 %v1348, 1.442695
        %v1370 = vpow.pop %v1369
        %v1371 = vmul.f32 %v1349, 1.442695
        %v1372 = vpow.pop %v1371
        %v1373 = vmul.f32 %v1350, 1.442695
        %v1374 = vpow.pop %v1373
        %v1375 = vadd.f32 %v1352, 1.0
        %v1376 = vadd.f32 %v1354, 1.0
        %v1377 = vadd.f32 %v1356, 1.0
        %v1378 = vadd.f32 %v1358, 1.0
        %v1379 = vadd.f32 %v1360, 1.0
        %v1380 = vadd.f32 %v1362, 1.0
        %v1381 = vadd.f32 %v1364, 1.0
        %v1382 = vadd.f32 %v1366, 1.0
        %v1383 = vadd.f32 %v1368, 1.0
        %v1384 = vadd.f32 %v1370, 1.0
        %v1385 = vadd.f32 %v1372, 1.0
        %v1386 = vadd.f32 %v1374, 1.0
        %v1387 = vrcp.pop %v1375
        %v1388 = vmul.f32 %v1375, %v1387
        %v1389 = vsub.f32 1.0, %v1388
        %v1390 = vmul.f32 %v1387, %v1389
        %v1391 = vadd.f32 %v1387, %v1390
        %vm1392 = vweird.f32 %v1375
        %vm1393 = vweird.f32 %v1387
        %vm1394 = vmor %vm1392, %vm1393
        %v1395 = vsel %vm1394, %v1387, %v1391
        %v1396 = vand.u32 2147483647, %v1375
        %vm1397 = vcmp.eq.f32.partialorder %v1396, 8.507059e+37
        %v1398 = vand.u32 %v1375, 2147483648
        %v1399 = vor.u32 1.1754944e-38, %v1398
        %v1400 = vsel %vm1397, %v1399, %v1395
        %v1401 = vmul.f32 1.0, %v1400
        %v1402 = vrcp.pop %v1376
        %v1403 = vmul.f32 %v1376, %v1402
        %v1404 = vsub.f32 1.0, %v1403
        %v1405 = vmul.f32 %v1402, %v1404
        %v1406 = vadd.f32 %v1402, %v1405
        %vm1407 = vweird.f32 %v1376
        %vm1408 = vweird.f32 %v1402
        %vm1409 = vmor %vm1407, %vm1408
        %v1410 = vsel %vm1409, %v1402, %v1406
        %v1411 = vand.u32 2147483647, %v1376
        %vm1412 = vcmp.eq.f32.partialorder %v1411, 8.507059e+37
        %v1413 = vand.u32 %v1376, 2147483648
        %v1414 = vor.u32 1.1754944e-38, %v1413
        %v1415 = vsel %vm1412, %v1414, %v1410
        %v1416 = vmul.f32 1.0, %v1415
        %v1417 = vrcp.pop %v1377
        %v1418 = vmul.f32 %v1377, %v1417
        %v1419 = vsub.f32 1.0, %v1418
        %v1420 = vmul.f32 %v1417, %v1419
        %v1421 = vadd.f32 %v1417, %v1420
        %vm1422 = vweird.f32 %v1377
        %vm1423 = vweird.f32 %v1417
        %vm1424 = vmor %vm1422, %vm1423
        %v1425 = vsel %vm1424, %v1417, %v1421
        %v1426 = vand.u32 2147483647, %v1377
        %vm1427 = vcmp.eq.f32.partialorder %v1426, 8.507059e+37
        %v1428 = vand.u32 %v1377, 2147483648
        %v1429 = vor.u32 1.1754944e-38, %v1428
        %v1430 = vsel %vm1427, %v1429, %v1425
        %v1431 = vmul.f32 1.0, %v1430
        %v1432 = vrcp.pop %v1378
        %v1433 = vmul.f32 %v1378, %v1432
        %v1434 = vsub.f32 1.0, %v1433
        %v1435 = vmul.f32 %v1432, %v1434
        %v1436 = vadd.f32 %v1432, %v1435
        %vm1437 = vweird.f32 %v1378
        %vm1438 = vweird.f32 %v1432
        %vm1439 = vmor %vm1437, %vm1438
        %v1440 = vsel %vm1439, %v1432, %v1436
        %v1441 = vand.u32 2147483647, %v1378
        %vm1442 = vcmp.eq.f32.partialorder %v1441, 8.507059e+37
        %v1443 = vand.u32 %v1378, 2147483648
        %v1444 = vor.u32 1.1754944e-38, %v1443
        %v1445 = vsel %vm1442, %v1444, %v1440
        %v1446 = vmul.f32 1.0, %v1445
        %v1447 = vrcp.pop %v1379
        %v1448 = vmul.f32 %v1379, %v1447
        %v1449 = vsub.f32 1.0, %v1448
        %v1450 = vmul.f32 %v1447, %v1449
        %v1451 = vadd.f32 %v1447, %v1450
        %vm1452 = vweird.f32 %v1379
        %vm1453 = vweird.f32 %v1447
        %vm1454 = vmor %vm1452, %vm1453
        %v1455 = vsel %vm1454, %v1447, %v1451
        %v1456 = vand.u32 2147483647, %v1379
        %vm1457 = vcmp.eq.f32.partialorder %v1456, 8.507059e+37
        %v1458 = vand.u32 %v1379, 2147483648
        %v1459 = vor.u32 1.1754944e-38, %v1458
        %v1460 = vsel %vm1457, %v1459, %v1455
        %v1461 = vmul.f32 1.0, %v1460
        %v1462 = vrcp.pop %v1380
        %v1463 = vmul.f32 %v1380, %v1462
        %v1464 = vsub.f32 1.0, %v1463
        %v1465 = vmul.f32 %v1462, %v1464
        %v1466 = vadd.f32 %v1462, %v1465
        %vm1467 = vweird.f32 %v1380
        %vm1468 = vweird.f32 %v1462
        %vm1469 = vmor %vm1467, %vm1468
        %v1470 = vsel %vm1469, %v1462, %v1466
        %v1471 = vand.u32 2147483647, %v1380
        %vm1472 = vcmp.eq.f32.partialorder %v1471, 8.507059e+37
        %v1473 = vand.u32 %v1380, 2147483648
        %v1474 = vor.u32 1.1754944e-38, %v1473
        %v1475 = vsel %vm1472, %v1474, %v1470
        %v1476 = vmul.f32 1.0, %v1475
        %v1477 = vrcp.pop %v1381
        %v1478 = vmul.f32 %v1381, %v1477
        %v1479 = vsub.f32 1.0, %v1478
        %v1480 = vmul.f32 %v1477, %v1479
        %v1481 = vadd.f32 %v1477, %v1480
        %vm1482 = vweird.f32 %v1381
        %vm1483 = vweird.f32 %v1477
        %vm1484 = vmor %vm1482, %vm1483
        %v1485 = vsel %vm1484, %v1477, %v1481
        %v1486 = vand.u32 2147483647, %v1381
        %vm1487 = vcmp.eq.f32.partialorder %v1486, 8.507059e+37
        %v1488 = vand.u32 %v1381, 2147483648
        %v1489 = vor.u32 1.1754944e-38, %v1488
        %v1490 = vsel %vm1487, %v1489, %v1485
        %v1491 = vmul.f32 1.0, %v1490
        %v1492 = vrcp.pop %v1382
        %v1493 = vmul.f32 %v1382, %v1492
        %v1494 = vsub.f32 1.0, %v1493
        %v1495 = vmul.f32 %v1492, %v1494
        %v1496 = vadd.f32 %v1492, %v1495
        %vm1497 = vweird.f32 %v1382
        %vm1498 = vweird.f32 %v1492
        %vm1499 = vmor %vm1497, %vm1498
        %v1500 = vsel %vm1499, %v1492, %v1496
        %v1501 = vand.u32 2147483647, %v1382
        %vm1502 = vcmp.eq.f32.partialorder %v1501, 8.507059e+37
        %v1503 = vand.u32 %v1382, 2147483648
        %v1504 = vor.u32 1.1754944e-38, %v1503
        %v1505 = vsel %vm1502, %v1504, %v1500
        %v1506 = vmul.f32 1.0, %v1505
        %v1507 = vrcp.pop %v1383
        %v1508 = vmul.f32 %v1383, %v1507
        %v1509 = vsub.f32 1.0, %v1508
        %v1510 = vmul.f32 %v1507, %v1509
        %v1511 = vadd.f32 %v1507, %v1510
        %vm1512 = vweird.f32 %v1383
        %vm1513 = vweird.f32 %v1507
        %vm1514 = vmor %vm1512, %vm1513
        %v1515 = vsel %vm1514, %v1507, %v1511
        %v1516 = vand.u32 2147483647, %v1383
        %vm1517 = vcmp.eq.f32.partialorder %v1516, 8.507059e+37
        %v1518 = vand.u32 %v1383, 2147483648
        %v1519 = vor.u32 1.1754944e-38, %v1518
        %v1520 = vsel %vm1517, %v1519, %v1515
        %v1521 = vmul.f32 1.0, %v1520
        %v1522 = vrcp.pop %v1384
        %v1523 = vmul.f32 %v1384, %v1522
        %v1524 = vsub.f32 1.0, %v1523
        %v1525 = vmul.f32 %v1522, %v1524
        %v1526 = vadd.f32 %v1522, %v1525
        %vm1527 = vweird.f32 %v1384
        %vm1528 = vweird.f32 %v1522
        %vm1529 = vmor %vm1527, %vm1528
        %v1530 = vsel %vm1529, %v1522, %v1526
        %v1531 = vand.u32 2147483647, %v1384
        %vm1532 = vcmp.eq.f32.partialorder %v1531, 8.507059e+37
        %v1533 = vand.u32 %v1384, 2147483648
        %v1534 = vor.u32 1.1754944e-38, %v1533
        %v1535 = vsel %vm1532, %v1534, %v1530
        %v1536 = vmul.f32 1.0, %v1535
        %v1537 = vrcp.pop %v1385
        %v1538 = vmul.f32 %v1385, %v1537
        %v1539 = vsub.f32 1.0, %v1538
        %v1540 = vmul.f32 %v1537, %v1539
        %v1541 = vadd.f32 %v1537, %v1540
        %vm1542 = vweird.f32 %v1385
        %vm1543 = vweird.f32 %v1537
        %vm1544 = vmor %vm1542, %vm1543
        %v1545 = vsel %vm1544, %v1537, %v1541
        %v1546 = vand.u32 2147483647, %v1385
        %vm1547 = vcmp.eq.f32.partialorder %v1546, 8.507059e+37
        %v1548 = vand.u32 %v1385, 2147483648
        %v1549 = vor.u32 1.1754944e-38, %v1548
        %v1550 = vsel %vm1547, %v1549, %v1545
        %v1551 = vmul.f32 1.0, %v1550
        %v1552 = vrcp.pop %v1386
        %v1553 = vmul.f32 %v1386, %v1552
        %v1554 = vsub.f32 1.0, %v1553
        %v1555 = vmul.f32 %v1552, %v1554
        %v1556 = vadd.f32 %v1552, %v1555
        %vm1557 = vweird.f32 %v1386
        %vm1558 = vweird.f32 %v1552
        %vm1559 = vmor %vm1557, %vm1558
        %v1560 = vsel %vm1559, %v1552, %v1556
        %v1561 = vand.u32 2147483647, %v1386
        %vm1562 = vcmp.eq.f32.partialorder %v1561, 8.507059e+37
        %v1563 = vand.u32 %v1386, 2147483648
        %v1564 = vor.u32 1.1754944e-38, %v1563
        %v1565 = vsel %vm1562, %v1564, %v1560
        %v1566 = vmul.f32 1.0, %v1565
        %v1567 = vmul.f32 %v1327, %v1401
        %v1568 = vmul.f32 %v1328, %v1416
        %v1569 = vmul.f32 %v1329, %v1431
        %v1570 = vmul.f32 %v1330, %v1446
        %v1571 = vmul.f32 %v1331, %v1461
        %v1572 = vmul.f32 %v1332, %v1476
        %v1573 = vmul.f32 %v1333, %v1491
        %v1574 = vmul.f32 %v1334, %v1506
        %v1575 = vmul.f32 %v1335, %v1521
        %v1576 = vmul.f32 %v1336, %v1536
        %v1577 = vmul.f32 %v1337, %v1551
        %v1578 = vmul.f32 %v1338, %v1566
        %v1579 = vld [vmem:[%s4] sm:$0xf]
        %v1580 = vpack.c.bf16 %v1570, %v1567
        %v1581 = vpack.c.bf16 %v1571, %v1568
        %v1582 = vpack.c.bf16 %v1572, %v1569
        %v1583 = vpack.c.bf16 %v1576, %v1573
        %v1584 = vpack.c.bf16 %v1577, %v1574
        %v1585 = vpack.c.bf16 %v1578, %v1575
        %v1586 = vld [vmem:[%s5] sm:$0xff]
        %1588 = vset.pattern.permute.xlu0 0
        %1589 = vperm.xlu0 %1588, %v1586
        %v1590 = vpop.permute.xlu0 %1589
        %vm1592 = vcmask 261120
        %v1594 = vsel %vm1592, %v1579, 0
        %1596 = vmatpush.bf16.msra.mxu0 0
        %1597 = vmatpush.bf16.msra.mxu0 0
        %1598 = vmatpush.bf16.msra.mxu0 0
        %1599 = vmatpush.bf16.msra.mxu0 0
        %1600 = vmatpush.bf16.msra.mxu0 0
        %1601 = vmatpush.bf16.msra.mxu0 0
        %1602 = vmatpush.bf16.msra.mxu0 %v1583
        %1603 = vmatpush.bf16.msra.mxu0 %v1580
        %1604 = vmatmul.bf16.gmra.mxu0 %v1594
        %v1605 = vpop.f32.mrf.mxu0
        %v1606 = vadd.f32 %v1590, %v1605
        %v1607 = vpop.f32.mrf.mxu0
        %1608 = vdwg.mxu0
        %1609 = vmatpush.bf16.msra.mxu0 0
        %1610 = vmatpush.bf16.msra.mxu0 0
        %1611 = vmatpush.bf16.msra.mxu0 0
        %1612 = vmatpush.bf16.msra.mxu0 0
        %1613 = vmatpush.bf16.msra.mxu0 0
        %1614 = vmatpush.bf16.msra.mxu0 0
        %1615 = vmatpush.bf16.msra.mxu0 %v1584
        %1616 = vmatpush.bf16.msra.mxu0 %v1581
        %1617 = vmatmul.bf16.gmra.mxu0 %v1594
        %v1618 = vpop.f32.mrf.mxu0
        %v1619 = vadd.f32 %v1590, %v1618
        %v1620 = vpop.f32.mrf.mxu0
        %1621 = vdwg.mxu0
        %1622 = vmatpush.bf16.msra.mxu0 0
        %1623 = vmatpush.bf16.msra.mxu0 0
        %1624 = vmatpush.bf16.msra.mxu0 0
        %1625 = vmatpush.bf16.msra.mxu0 0
        %1626 = vmatpush.bf16.msra.mxu0 0
        %1627 = vmatpush.bf16.msra.mxu0 0
        %1628 = vmatpush.bf16.msra.mxu0 %v1585
        %1629 = vmatpush.bf16.msra.mxu0 %v1582
        %1630 = vmatmul.bf16.gmra.mxu0 %v1594
        %v1631 = vpop.f32.mrf.mxu0
        %v1632 = vadd.f32 %v1590, %v1631
        %v1633 = vpop.f32.mrf.mxu0
        %1634 = vdwg.mxu0
        %1635 = vst [vmem:[%s300] sm:$0xff] %v1606
        %1636 = vst [vmem:[%s300 + $0x8] sm:$0xff] %v1619
        %1637 = vst [vmem:[%s300 + $0x10] sm:$0xff] %v1632
        %s1638 = sand.u32 %s184, 1
        %s1639 = scalar_lea.sflag [#allocation3], %s1638
        %s1640 = sand.u32 %s184, 1
        %s1641 = smul.addr %s1640, 24
        %s1642 = scalar_lea.vmem [#allocation2], %s1641
        // Predicated region
        $region45: #{tpu_custom_call.1} parent=43 // pred_check
          %p1643 = pneg %p194
        $region46: #{tpu_custom_call.1} parent=43 // pred_check_branch
          %1645 = sbr.rel (%p1643) target = $region48
        $region47: #{tpu_custom_call.1} parent=43 // pred_region
          %s1646 = smul.u32 3, %s25
          %1648 = vsyncadd %s1639, 0
          %s1649 = smul.addr %s24, 3
          %s1650 = sadd.s32 %s1646, %s1649
          %s1651 = smul.addr %s1650, 8
          %s1652 = scalar_lea.hbm %s6, %s1651
          %s1654 = sshll.u32 %s1642, 4
          %s1655 = int_to_ptr.vmem [resolvable:$true] %s1654
          %s1656 = sshll.u32 %s1652, 4
          %s1657 = int_to_ptr.hbm [resolvable:$true] %s1656
          %1659 = dma.vmem_to_hbm [thread:$0]  %s1655, 384, %s1657, %s1639
        $region48: #{tpu_custom_call.1} parent=43 // pred_fallthru
          _
      $region44: #{tpu_custom_call.1} parent=5 // pred_fallthru
        _
      %p1660 = scmp.le.s32.totalorder 2, %s15
      // Predicated region
      $region49: #{tpu_custom_call.1} parent=5 // pred_check
        %p1661 = pneg %p1660
      $region50: #{tpu_custom_call.1} parent=5 // pred_check_branch
        %1663 = sbr.rel (%p1661) target = $region52
      $region51: #{tpu_custom_call.1} parent=5 // pred_region
        %s1664 = ssub.s32 %s15, 2
        // Predicated region
        $region53: #{tpu_custom_call.1} parent=51 // pred_check
          %p1665 = pneg %p200
        $region54: #{tpu_custom_call.1} parent=51 // pred_check_branch
          %1667 = sbr.rel (%p1665) target = $region56
        $region55: #{tpu_custom_call.1} parent=51 // pred_region
          %s1668 = sand.u32 %s185, 1
          %s1669 = scalar_lea.sflag [#allocation3], %s1668
          %s1670 = sand.u32 %s185, 1
          %s1671 = smul.addr %s1670, 24
          %s1672 = scalar_lea.vmem [#allocation2], %s1671
          %1674 = dma.done %s1669, 384
        $region56: #{tpu_custom_call.1} parent=51 // pred_fallthru
          _
      $region52: #{tpu_custom_call.1} parent=5 // pred_fallthru
        _
    $region6: #{tpu_custom_call.1} parent=1 // loop_footer
      %s19 = sadd.s32 1, %s15
    $region7: #{tpu_custom_call.1} parent=1 // loop_footer_branch
      %14 = sbr.rel target = $region3
    $region8: #{tpu_custom_call.1} parent=1 // loop_exit
      _
    %1675 = vsyncpa [#allocation3], 1
    %s1676 = scalar_lea.sflag [#allocation3], 1
    %1677 = vsyncpa %s1676, 1

</llo_original>
